<compile_context>
chip_gen: v7x
topology: tpu7x:2x2x1
jax: 0.10.0
libtpu: 0.0.40
codegen_flags: <defaults>
</compile_context>

<pallas_src>
import functools

import jax
import jax.numpy as jnp
from jax.experimental import pallas as pl
from jax.experimental.pallas import tpu as pltpu

NUM_NODES = 32
EMB_SIZE = 32
BATCH = 16


def _line_kernel(vi_ref, vj_ref, ti_ref, tj_ref, out_ref, *, d, num_out):
    """One-hot MXU gather + fused dot-product reduction.

    vi_ref, vj_ref : (1, B)         int32 node indices (lane-dense)
    ti_ref, tj_ref : (num_out*d, N) f32 transposed, feature-packed embedding tables
    out_ref        : (num_out, B)   f32 proximity scores (lane-dense)
    """
    n = ti_ref.shape[1]
    b = vi_ref.shape[1]

    # Clamp in-kernel (VPU, trivial) -> every one-hot column has exactly one hit.
    vi = jnp.clip(vi_ref[...], 0, n - 1)                     # (1, B)
    vj = jnp.clip(vj_ref[...], 0, n - 1)

    node_iota = jax.lax.broadcasted_iota(jnp.int32, (n, b), 0)
    oh_i = (node_iota == vi).astype(jnp.float32)             # (N, B) one-hot columns
    oh_j = (node_iota == vj).astype(jnp.float32)

    # Row gather on the MXU: (KD, N) @ (N, B) -> (KD, B); batch stays on lanes.
    gi = jnp.dot(ti_ref[...], oh_i,
                 preferred_element_type=jnp.float32,
                 precision=jax.lax.Precision.HIGHEST)
    gj = jnp.dot(tj_ref[...], oh_j,
                 preferred_element_type=jnp.float32,
                 precision=jax.lax.Precision.HIGHEST)

    prod = gi * gj                                           # (KD, B)
    # Per-order sublane reduction; d (=32) is a multiple of 8 so the slices stay
    # tile-aligned (no relayout copies).
    sums = [jnp.sum(prod[k * d:(k + 1) * d, :], axis=0, keepdims=True)
            for k in range(num_out)]
    out_ref[...] = sums[0] if num_out == 1 else jnp.concatenate(sums, axis=0)


def line_forward(params, v_i, v_j, order="second"):
    """Pallas implementation of LINEModel.forward."""
    first_w, second_w, context_w = params
    n_nodes, d = first_w.shape
    b = v_i.shape[0]

    vi = v_i.astype(jnp.int32).reshape(1, b)
    vj = v_j.astype(jnp.int32).reshape(1, b)

    if order == "first":
        ti = first_w.T                                         # (D, N)
        tj = first_w.T
        num_out = 1
    elif order == "second":
        ti = second_w.T                                        # (D, N)
        tj = context_w.T
        num_out = 1
    else:  # 'both' / anything else -> [first_order, second_order]
        ti = jnp.concatenate([first_w, second_w], axis=1).T    # (2D, N)
        tj = jnp.concatenate([first_w, context_w], axis=1).T   # (2D, N)
        num_out = 2

    # TODO(synk): for realistic node counts the tables won't fit in VMEM; switch the
    # table inputs to memory_space=pl.ANY (HBM) and gather rows via per-index DMA,
    # and tile the batch axis with a grid for batches beyond a few thousand.
    out = pl.pallas_call(
        functools.partial(_line_kernel, d=d, num_out=num_out),
        out_shape=jax.ShapeDtypeStruct((num_out, b), jnp.float32),
        in_specs=[pl.BlockSpec(memory_space=pltpu.MemorySpace.VMEM)] * 4,
        out_specs=pl.BlockSpec(memory_space=pltpu.MemorySpace.VMEM),
    )(vi, vj, ti.astype(jnp.float32), tj.astype(jnp.float32))

    if order in ("first", "second"):
        return out.reshape(b)
    return [out[0], out[1]]


def init_params(key, num_nodes=NUM_NODES, embedding_size=EMB_SIZE):
    # N(0,1) init, matching torch.nn.Embedding's default.
    k1, k2, k3 = jax.random.split(key, 3)
    first_w = jax.random.normal(k1, (num_nodes, embedding_size), jnp.float32)
    second_w = jax.random.normal(k2, (num_nodes, embedding_size), jnp.float32)
    context_w = jax.random.normal(k3, (num_nodes, embedding_size), jnp.float32)
    return first_w, second_w, context_w


def _reference(params, v_i, v_j):
    first_w, second_w, context_w = params
    vi_emb = first_w[v_i]
    vj_emb = first_w[v_j]
    vi_emb_2 = second_w[v_i]
    vj_ctx = context_w[v_j]
    return (jnp.sum(vi_emb * vj_emb, axis=-1),
            jnp.sum(vi_emb_2 * vj_ctx, axis=-1))


if __name__ == "__main__":
    key = jax.random.PRNGKey(0)
    kp, ki, kj = jax.random.split(key, 3)
    params = init_params(kp)

    v_i = jax.random.randint(ki, (BATCH,), 0, NUM_NODES, dtype=jnp.int32)
    v_j = jax.random.randint(kj, (BATCH,), 0, NUM_NODES, dtype=jnp.int32)

    ref_first, ref_second = _reference(params, v_i, v_j)

    # order='both' exercises both outputs.
    first_o, second_o = line_forward(params, v_i, v_j, order="both")
    jax.block_until_ready(first_o)
    jax.block_until_ready(second_o)
    assert jnp.allclose(first_o, ref_first, atol=1e-4, rtol=1e-4)
    assert jnp.allclose(second_o, ref_second, atol=1e-4, rtol=1e-4)

    # order='first' specialized path.
    out_first = line_forward(params, v_i, v_j, order="first")
    jax.block_until_ready(out_first)
    assert jnp.allclose(out_first, ref_first, atol=1e-4, rtol=1e-4)

    # Default-order path (order='second'), as in LINEModel(order='second').
    out_default = line_forward(params, v_i, v_j)
    jax.block_until_ready(out_default)
    assert jnp.allclose(out_default, ref_second, atol=1e-4, rtol=1e-4)

    print("KERNEL_OK")
</pallas_src>

<mosaic_0001>
module attributes {stable_mosaic.version = 11 : i64} {
  func.func @_line_kernel(%arg0: memref<1x16xi32, #tpu.memory_space<vmem>>, %arg1: memref<1x16xi32, #tpu.memory_space<vmem>>, %arg2: memref<64x32xf32, #tpu.memory_space<vmem>>, %arg3: memref<64x32xf32, #tpu.memory_space<vmem>>, %arg4: memref<2x16xf32, #tpu.memory_space<vmem>>) attributes {dimension_semantics = [], scalar_prefetch = 0 : i64, scratch_operands = 0 : i64, tpu.core_type = #tpu.core_type<tc>} {
    %c0 = arith.constant 0 : index
    %c0_0 = arith.constant 0 : index
    %0 = vector.load %arg0[%c0, %c0_0] : memref<1x16xi32, #tpu.memory_space<vmem>>, vector<1x16xi32>
    %c0_i32 = arith.constant 0 : i32
    %c31_i32 = arith.constant 31 : i32
    %1 = vector.broadcast %c0_i32 : i32 to vector<1x16xi32>
    %2 = arith.maxsi %1, %0 : vector<1x16xi32>
    %3 = vector.broadcast %c31_i32 : i32 to vector<1x16xi32>
    %4 = arith.minsi %3, %2 : vector<1x16xi32>
    %c0_1 = arith.constant 0 : index
    %c0_2 = arith.constant 0 : index
    %5 = vector.load %arg1[%c0_1, %c0_2] : memref<1x16xi32, #tpu.memory_space<vmem>>, vector<1x16xi32>
    %c0_i32_3 = arith.constant 0 : i32
    %c31_i32_4 = arith.constant 31 : i32
    %6 = vector.broadcast %c0_i32_3 : i32 to vector<1x16xi32>
    %7 = arith.maxsi %6, %5 : vector<1x16xi32>
    %8 = vector.broadcast %c31_i32_4 : i32 to vector<1x16xi32>
    %9 = arith.minsi %8, %7 : vector<1x16xi32>
    %10 = tpu.iota {dimensions = array<i32: 0>} : vector<32x16xi32>
    %11 = vector.broadcast %4 : vector<1x16xi32> to vector<32x16xi32>
    %12 = arith.cmpi eq, %10, %11 : vector<32x16xi32>
    %13 = arith.extui %12 : vector<32x16xi1> to vector<32x16xi32>
    %14 = arith.sitofp %13 : vector<32x16xi32> to vector<32x16xf32>
    %15 = vector.broadcast %9 : vector<1x16xi32> to vector<32x16xi32>
    %16 = arith.cmpi eq, %10, %15 : vector<32x16xi32>
    %17 = arith.extui %16 : vector<32x16xi1> to vector<32x16xi32>
    %18 = arith.sitofp %17 : vector<32x16xi32> to vector<32x16xf32>
    %c0_5 = arith.constant 0 : index
    %c0_6 = arith.constant 0 : index
    %19 = vector.load %arg2[%c0_5, %c0_6] : memref<64x32xf32, #tpu.memory_space<vmem>>, vector<64x32xf32>
    %cst = arith.constant dense<0.000000e+00> : vector<64x16xf32>
    %20 = tpu.matmul %19, %14, %cst {dimension_numbers = #tpu.dot_dimension_numbers<[1], [0], [0], [1], [0, 0, 1, 1], [], []>, precision = #tpu.contract_precision<fp32>} : vector<64x32xf32>, vector<32x16xf32>, vector<64x16xf32> -> vector<64x16xf32>
    %c0_7 = arith.constant 0 : index
    %c0_8 = arith.constant 0 : index
    %21 = vector.load %arg3[%c0_7, %c0_8] : memref<64x32xf32, #tpu.memory_space<vmem>>, vector<64x32xf32>
    %cst_9 = arith.constant dense<0.000000e+00> : vector<64x16xf32>
    %22 = tpu.matmul %21, %18, %cst_9 {dimension_numbers = #tpu.dot_dimension_numbers<[1], [0], [0], [1], [0, 0, 1, 1], [], []>, precision = #tpu.contract_precision<fp32>} : vector<64x32xf32>, vector<32x16xf32>, vector<64x16xf32> -> vector<64x16xf32>
    %23 = arith.mulf %20, %22 : vector<64x16xf32>
    %24 = vector.extract_strided_slice %23 {offsets = [0, 0], sizes = [32, 16], strides = [1, 1]} : vector<64x16xf32> to vector<32x16xf32>
    %cst_10 = arith.constant dense<0.000000e+00> : vector<16xf32>
    %25 = vector.multi_reduction <add>, %24, %cst_10 [0] : vector<32x16xf32> to vector<16xf32>
    %26 = vector.shape_cast %25 : vector<16xf32> to vector<1x16xf32>
    %27 = vector.extract_strided_slice %23 {offsets = [32, 0], sizes = [32, 16], strides = [1, 1]} : vector<64x16xf32> to vector<32x16xf32>
    %cst_11 = arith.constant dense<0.000000e+00> : vector<16xf32>
    %28 = vector.multi_reduction <add>, %27, %cst_11 [0] : vector<32x16xf32> to vector<16xf32>
    %29 = vector.shape_cast %28 : vector<16xf32> to vector<1x16xf32>
    %30 = tpu.concatenate %26, %29 in 0 : vector<1x16xf32>, vector<1x16xf32> -> vector<2x16xf32>
    %c0_12 = arith.constant 0 : index
    %c0_13 = arith.constant 0 : index
    %31 = vector.load %arg4[%c0_12, %c0_13] : memref<2x16xf32, #tpu.memory_space<vmem>>, vector<2x16xf32>
    tpu.vector_store %arg4[%c0_12, %c0_13], %30 {strides = array<i32>} : memref<2x16xf32, #tpu.memory_space<vmem>>, vector<2x16xf32>,
    return
  }
}

</mosaic_0001>

<llo_original>
// kernel: tpu_custom_call.1
$region0: #{tpu_custom_call.1}
  #allocation0 [shape = 'u32[]', space=smem, size = 0x4, offset = 0x4, fixed_abs, tag = 'smem constant byte address 0x4 - core index']
  #allocation1 [shape = 'u32[144,128]{1,0:T(1,128)}', space=vmem, size = 0x12000, scoped, tag = 'internal scratch']
  %s0 = inlined_call_operand.vmem [shape: s32[1,16], index: 0, kind: input, shape index: {}]
  %s1 = inlined_call_operand.vmem [shape: s32[1,16], index: 1, kind: input, shape index: {}]
  %s2 = inlined_call_operand.vmem [shape: f32[64,32], index: 2, kind: input, shape index: {}]
  %s3 = inlined_call_operand.vmem [shape: f32[64,32], index: 3, kind: input, shape index: {}]
  %s4 = inlined_call_operand.hbm [shape: f32[2,16], index: 4, kind: output, shape index: {}]
  %s5 = sld [smem:[#allocation0]]
  $region26: #{tpu_custom_call.1} parent=0
    _
  %s7 = ssub.s32 1, %s5
  %s8 = scalar_select 0, %s7, %s5
  $region1: #{tpu_custom_call.1} parent=0
    #allocation2 [shape = 'u8[1024]{0}', space=vmem, size = 0x400, scoped, tag = 'output window, operand 0, single buffered']
    #allocation3 [shape = 's32[1]{0}', space=sflag, size = 0x4, scoped, tag = 'scoped memory for tpu_custom_call.1']
    %9 = vsyncpa [#allocation3], 0
    // Predicated region
    $region2: #{tpu_custom_call.1} parent=1 // pred_check
      _
    $region3: #{tpu_custom_call.1} parent=1 // pred_check_branch
      %11 = sbr.rel (0) target = $region5
    $region4: #{tpu_custom_call.1} parent=1 // pred_region
      _
    $region5: #{tpu_custom_call.1} parent=1 // pred_fallthru
      _
    // Predicated region
    $region6: #{tpu_custom_call.1} parent=1 // pred_check
      _
    $region7: #{tpu_custom_call.1} parent=1 // pred_check_branch
      %13 = sbr.rel (0) target = $region9
    $region8: #{tpu_custom_call.1} parent=1 // pred_region
      _
    $region9: #{tpu_custom_call.1} parent=1 // pred_fallthru
      _
    // Predicated region
    $region10: #{tpu_custom_call.1} parent=1 // pred_check
      _
    $region11: #{tpu_custom_call.1} parent=1 // pred_check_branch
      %15 = sbr.rel (0) target = $region13
    $region12: #{tpu_custom_call.1} parent=1 // pred_region
      _
    $region13: #{tpu_custom_call.1} parent=1 // pred_fallthru
      _
    // Predicated region
    $region14: #{tpu_custom_call.1} parent=1 // pred_check
      _
    $region15: #{tpu_custom_call.1} parent=1 // pred_check_branch
      %17 = sbr.rel (0) target = $region17
    $region16: #{tpu_custom_call.1} parent=1 // pred_region
      _
    $region17: #{tpu_custom_call.1} parent=1 // pred_fallthru
      _
    %v18 = vld [vmem:[%s0] sm:$0x1]
    %vm19 = vcmp.gt.s32.totalorder %v18, 0
    %v20 = vsel %vm19, %v18, 0
    %vm21 = vcmp.lt.s32.totalorder %v20, 31
    %v22 = vsel %vm21, %v20, 31
    %v23 = vld [vmem:[%s1] sm:$0x1]
    %vm24 = vcmp.gt.s32.totalorder %v23, 0
    %v25 = vsel %vm24, %v23, 0
    %vm26 = vcmp.lt.s32.totalorder %v25, 31
    %v27 = vsel %vm26, %v25, 31
    %v28 = vlaneseq
    %v29 = vshrl.u32 %v28, 7
    %v30 = vadd.s32 %v29, 8
    %v31 = vadd.s32 %v29, 16
    %v32 = vadd.s32 %v29, 24
    %v33 = vlaneseq
    %v34 = vshrl.u32 %v33, 7
    %v35 = vsub.s32 0, %v34
    %v36 = vrot.slane %v22, %v35
    %vm37 = vcmp.eq.s32.totalorder %v29, %v36
    %vm38 = vcmp.eq.s32.totalorder %v30, %v36
    %vm39 = vcmp.eq.s32.totalorder %v31, %v36
    %vm40 = vcmp.eq.s32.totalorder %v32, %v36
    %v41 = vsel %vm37, 1, 0
    %v42 = vsel %vm38, 1, 0
    %v43 = vsel %vm39, 1, 0
    %v44 = vsel %vm40, 1, 0
    %v45 = vcvt.s32.f32 %v41
    %v46 = vcvt.s32.f32 %v42
    %v47 = vcvt.s32.f32 %v43
    %v48 = vcvt.s32.f32 %v44
    %v49 = vlaneseq
    %v50 = vshrl.u32 %v49, 7
    %v51 = vsub.s32 0, %v50
    %v52 = vrot.slane %v27, %v51
    %vm53 = vcmp.eq.s32.totalorder %v29, %v52
    %vm54 = vcmp.eq.s32.totalorder %v30, %v52
    %vm55 = vcmp.eq.s32.totalorder %v31, %v52
    %vm56 = vcmp.eq.s32.totalorder %v32, %v52
    %v57 = vsel %vm53, 1, 0
    %v58 = vsel %vm54, 1, 0
    %v59 = vsel %vm55, 1, 0
    %v60 = vsel %vm56, 1, 0
    %v61 = vcvt.s32.f32 %v57
    %v62 = vcvt.s32.f32 %v58
    %v63 = vcvt.s32.f32 %v59
    %v64 = vcvt.s32.f32 %v60
    %v65 = vld [vmem:[%s2] sm:$0xff]
    %v66 = vld [vmem:[%s2 + $0x8] sm:$0xff]
    %v67 = vld [vmem:[%s2 + $0x10] sm:$0xff]
    %v68 = vld [vmem:[%s2 + $0x18] sm:$0xff]
    %v69 = vld [vmem:[%s2 + $0x20] sm:$0xff]
    %v70 = vld [vmem:[%s2 + $0x28] sm:$0xff]
    %v71 = vld [vmem:[%s2 + $0x30] sm:$0xff]
    %v72 = vld [vmem:[%s2 + $0x38] sm:$0xff]
    %vm73 = vcmask 261120
    %v75 = vsel %vm73, %v65, 0
    %v78 = vsel %vm73, %v66, 0
    %v81 = vsel %vm73, %v67, 0
    %v84 = vsel %vm73, %v68, 0
    %v87 = vsel %vm73, %v69, 0
    %v90 = vsel %vm73, %v70, 0
    %v93 = vsel %vm73, %v71, 0
    %v96 = vsel %vm73, %v72, 0
    %98 = vmatprep.subr.mxu0 0.0
    %v99 = vand.u32 %v45, 4294901760
    %100 = vmatpush1.msra.mxu0 %v99
    %101 = vmatprep.subr.mxu0 0.0
    %v102 = vand.u32 %v46, 4294901760
    %103 = vmatpush1.msra.mxu0 %v102
    %104 = vmatprep.subr.mxu0 0.0
    %v105 = vand.u32 %v47, 4294901760
    %106 = vmatpush1.msra.mxu0 %v105
    %107 = vmatprep.subr.mxu0 0.0
    %v108 = vand.u32 %v48, 4294901760
    %109 = vmatpush1.msra.mxu0 %v108
    %110 = vmatprep.subr.mxu0 0.0
    %111 = vmatpush1.msra.mxu0 0.0
    %112 = vmatprep.subr.mxu0 0.0
    %113 = vmatpush1.msra.mxu0 0.0
    %114 = vmatprep.subr.mxu0 0.0
    %115 = vmatpush1.msra.mxu0 0.0
    %116 = vmatprep.subr.mxu0 0.0
    %117 = vmatpush1.msra.mxu0 0.0
    %118 = vmatprep.subr.mxu0 0.0
    %119 = vmatpush1.msra.mxu0 0.0
    %120 = vmatprep.subr.mxu0 0.0
    %121 = vmatpush1.msra.mxu0 0.0
    %122 = vmatprep.subr.mxu0 0.0
    %123 = vmatpush1.msra.mxu0 0.0
    %124 = vmatprep.subr.mxu0 0.0
    %125 = vmatpush1.msra.mxu0 0.0
    %126 = vmatprep.subr.mxu0 0.0
    %127 = vmatpush1.msra.mxu0 0.0
    %128 = vmatprep.subr.mxu0 0.0
    %129 = vmatpush1.msra.mxu0 0.0
    %130 = vmatprep.subr.mxu0 0.0
    %131 = vmatpush1.msra.mxu0 0.0
    %132 = vmatprep.subr.mxu0 0.0
    %133 = vmatpush1.msra.mxu0 0.0
    %134 = vmatprep.subr.mxu0 0.0
    %135 = vmatpush1.msra.mxu0 0.0
    %136 = vmatprep.subr.mxu0 0.0
    %137 = vmatpush1.msra.mxu0 0.0
    %138 = vmatprep.subr.mxu0 0.0
    %139 = vmatpush1.msra.mxu0 0.0
    %140 = vmatprep.subr.mxu0 0.0
    %141 = vmatpush1.msra.mxu0 0.0
    %142 = vmatprep.subr.mxu0 0.0
    %143 = vmatpush1.msra.mxu0 0.0
    %144 = vmatprep.subr.mxu0 0.0
    %145 = vmatpush1.msra.mxu0 0.0
    %146 = vmatprep.subr.mxu0 0.0
    %147 = vmatpush1.msra.mxu0 0.0
    %148 = vmatprep.subr.mxu0 0.0
    %149 = vmatpush1.msra.mxu0 0.0
    %150 = vmatprep.subr.mxu0 0.0
    %151 = vmatpush1.msra.mxu0 0.0
    %152 = vmatprep.subr.mxu0 0.0
    %153 = vmatpush1.msra.mxu0 0.0
    %154 = vmatprep.subr.mxu0 0.0
    %155 = vmatpush1.msra.mxu0 0.0
    %156 = vmatprep.subr.mxu0 0.0
    %157 = vmatpush1.msra.mxu0 0.0
    %158 = vmatprep.subr.mxu0 0.0
    %159 = vmatpush1.msra.mxu0 0.0
    %160 = vmatprep.subr.mxu0 0.0
    %161 = vmatpush1.msra.mxu0 0.0
    %162 = vmatprep.subr.mxu0 0.0
    %163 = vmatpush1.msra.mxu0 0.0
    %164 = vmatprep.subr.mxu0 0.0
    %165 = vmatpush1.msra.mxu0 0.0
    %166 = vmatprep.mubr.f32.mxu0 0.0
    %v167 = vand.u32 %v75, 4294901760
    %v168 = vsub.f32 %v75, %v167
    %v169 = vand.u32 %v168, 4294901760
    %v170 = vsub.f32 %v168, %v169
    %v171 = vand.u32 %v170, 4294901760
    %172 = vmatmul.mubr.f32.gmra.mrb[0].mxu0 %v171
    %v173 = vpop.f32.mrb[0].mxu0
    %v174 = vadd.f32 0.0, %v173
    %v175 = vpop.f32.mrb[0].mxu0
    %176 = vmatprep.mubr.f32.mxu0 0.0
    %v177 = vand.u32 %v78, 4294901760
    %v178 = vsub.f32 %v78, %v177
    %v179 = vand.u32 %v178, 4294901760
    %v180 = vsub.f32 %v178, %v179
    %v181 = vand.u32 %v180, 4294901760
    %182 = vmatmul.mubr.f32.gmra.mrb[0].mxu0 %v181
    %v183 = vpop.f32.mrb[0].mxu0
    %v184 = vadd.f32 0.0, %v183
    %v185 = vpop.f32.mrb[0].mxu0
    %186 = vmatprep.mubr.f32.mxu0 0.0
    %v187 = vand.u32 %v81, 4294901760
    %v188 = vsub.f32 %v81, %v187
    %v189 = vand.u32 %v188, 4294901760
    %v190 = vsub.f32 %v188, %v189
    %v191 = vand.u32 %v190, 4294901760
    %192 = vmatmul.mubr.f32.gmra.mrb[0].mxu0 %v191
    %v193 = vpop.f32.mrb[0].mxu0
    %v194 = vadd.f32 0.0, %v193
    %v195 = vpop.f32.mrb[0].mxu0
    %196 = vmatprep.mubr.f32.mxu0 0.0
    %v197 = vand.u32 %v84, 4294901760
    %v198 = vsub.f32 %v84, %v197
    %v199 = vand.u32 %v198, 4294901760
    %v200 = vsub.f32 %v198, %v199
    %v201 = vand.u32 %v200, 4294901760
    %202 = vmatmul.mubr.f32.gmra.mrb[0].mxu0 %v201
    %v203 = vpop.f32.mrb[0].mxu0
    %v204 = vadd.f32 0.0, %v203
    %v205 = vpop.f32.mrb[0].mxu0
    %206 = vmatprep.mubr.f32.mxu0 0.0
    %v207 = vand.u32 %v87, 4294901760
    %v208 = vsub.f32 %v87, %v207
    %v209 = vand.u32 %v208, 4294901760
    %v210 = vsub.f32 %v208, %v209
    %v211 = vand.u32 %v210, 4294901760
    %212 = vmatmul.mubr.f32.gmra.mrb[0].mxu0 %v211
    %v213 = vpop.f32.mrb[0].mxu0
    %v214 = vadd.f32 0.0, %v213
    %v215 = vpop.f32.mrb[0].mxu0
    %216 = vmatprep.mubr.f32.mxu0 0.0
    %v217 = vand.u32 %v90, 4294901760
    %v218 = vsub.f32 %v90, %v217
    %v219 = vand.u32 %v218, 4294901760
    %v220 = vsub.f32 %v218, %v219
    %v221 = vand.u32 %v220, 4294901760
    %222 = vmatmul.mubr.f32.gmra.mrb[0].mxu0 %v221
    %v223 = vpop.f32.mrb[0].mxu0
    %v224 = vadd.f32 0.0, %v223
    %v225 = vpop.f32.mrb[0].mxu0
    %226 = vmatprep.mubr.f32.mxu0 0.0
    %v227 = vand.u32 %v93, 4294901760
    %v228 = vsub.f32 %v93, %v227
    %v229 = vand.u32 %v228, 4294901760
    %v230 = vsub.f32 %v228, %v229
    %v231 = vand.u32 %v230, 4294901760
    %232 = vmatmul.mubr.f32.gmra.mrb[0].mxu0 %v231
    %v233 = vpop.f32.mrb[0].mxu0
    %v234 = vadd.f32 0.0, %v233
    %v235 = vpop.f32.mrb[0].mxu0
    %236 = vmatprep.mubr.f32.mxu0 0.0
    %v237 = vand.u32 %v96, 4294901760
    %v238 = vsub.f32 %v96, %v237
    %v239 = vand.u32 %v238, 4294901760
    %v240 = vsub.f32 %v238, %v239
    %v241 = vand.u32 %v240, 4294901760
    %242 = vmatmul.mubr.f32.gmra.mrb[0].mxu0 %v241
    %v243 = vpop.f32.mrb[0].mxu0
    %v244 = vadd.f32 0.0, %v243
    %v245 = vpop.f32.mrb[0].mxu0
    %246 = vdwg.mxu0
    %247 = vmatprep.subr.mxu0 0.0
    %v248 = vand.u32 %v45, 4294901760
    %v249 = vsub.f32 %v45, %v248
    %v250 = vand.u32 %v249, 4294901760
    %v251 = vsub.f32 %v249, %v250
    %v252 = vand.u32 %v251, 4294901760
    %253 = vmatpush1.msra.mxu0 %v252
    %254 = vmatprep.subr.mxu0 0.0
    %v255 = vand.u32 %v46, 4294901760
    %v256 = vsub.f32 %v46, %v255
    %v257 = vand.u32 %v256, 4294901760
    %v258 = vsub.f32 %v256, %v257
    %v259 = vand.u32 %v258, 4294901760
    %260 = vmatpush1.msra.mxu0 %v259
    %261 = vmatprep.subr.mxu0 0.0
    %v262 = vand.u32 %v47, 4294901760
    %v263 = vsub.f32 %v47, %v262
    %v264 = vand.u32 %v263, 4294901760
    %v265 = vsub.f32 %v263, %v264
    %v266 = vand.u32 %v265, 4294901760
    %267 = vmatpush1.msra.mxu0 %v266
    %268 = vmatprep.subr.mxu0 0.0
    %v269 = vand.u32 %v48, 4294901760
    %v270 = vsub.f32 %v48, %v269
    %v271 = vand.u32 %v270, 4294901760
    %v272 = vsub.f32 %v270, %v271
    %v273 = vand.u32 %v272, 4294901760
    %274 = vmatpush1.msra.mxu0 %v273
    %275 = vmatprep.subr.mxu0 0.0
    %276 = vmatpush1.msra.mxu0 0.0
    %277 = vmatprep.subr.mxu0 0.0
    %278 = vmatpush1.msra.mxu0 0.0
    %279 = vmatprep.subr.mxu0 0.0
    %280 = vmatpush1.msra.mxu0 0.0
    %281 = vmatprep.subr.mxu0 0.0
    %282 = vmatpush1.msra.mxu0 0.0
    %283 = vmatprep.subr.mxu0 0.0
    %284 = vmatpush1.msra.mxu0 0.0
    %285 = vmatprep.subr.mxu0 0.0
    %286 = vmatpush1.msra.mxu0 0.0
    %287 = vmatprep.subr.mxu0 0.0
    %288 = vmatpush1.msra.mxu0 0.0
    %289 = vmatprep.subr.mxu0 0.0
    %290 = vmatpush1.msra.mxu0 0.0
    %291 = vmatprep.subr.mxu0 0.0
    %292 = vmatpush1.msra.mxu0 0.0
    %293 = vmatprep.subr.mxu0 0.0
    %294 = vmatpush1.msra.mxu0 0.0
    %295 = vmatprep.subr.mxu0 0.0
    %296 = vmatpush1.msra.mxu0 0.0
    %297 = vmatprep.subr.mxu0 0.0
    %298 = vmatpush1.msra.mxu0 0.0
    %299 = vmatprep.subr.mxu0 0.0
    %300 = vmatpush1.msra.mxu0 0.0
    %301 = vmatprep.subr.mxu0 0.0
    %302 = vmatpush1.msra.mxu0 0.0
    %303 = vmatprep.subr.mxu0 0.0
    %304 = vmatpush1.msra.mxu0 0.0
    %305 = vmatprep.subr.mxu0 0.0
    %306 = vmatpush1.msra.mxu0 0.0
    %307 = vmatprep.subr.mxu0 0.0
    %308 = vmatpush1.msra.mxu0 0.0
    %309 = vmatprep.subr.mxu0 0.0
    %310 = vmatpush1.msra.mxu0 0.0
    %311 = vmatprep.subr.mxu0 0.0
    %312 = vmatpush1.msra.mxu0 0.0
    %313 = vmatprep.subr.mxu0 0.0
    %314 = vmatpush1.msra.mxu0 0.0
    %315 = vmatprep.subr.mxu0 0.0
    %316 = vmatpush1.msra.mxu0 0.0
    %317 = vmatprep.subr.mxu0 0.0
    %318 = vmatpush1.msra.mxu0 0.0
    %319 = vmatprep.subr.mxu0 0.0
    %320 = vmatpush1.msra.mxu0 0.0
    %321 = vmatprep.subr.mxu0 0.0
    %322 = vmatpush1.msra.mxu0 0.0
    %323 = vmatprep.subr.mxu0 0.0
    %324 = vmatpush1.msra.mxu0 0.0
    %325 = vmatprep.subr.mxu0 0.0
    %326 = vmatpush1.msra.mxu0 0.0
    %327 = vmatprep.subr.mxu0 0.0
    %328 = vmatpush1.msra.mxu0 0.0
    %329 = vmatprep.subr.mxu0 0.0
    %330 = vmatpush1.msra.mxu0 0.0
    %331 = vmatprep.mubr.f32.mxu0 0.0
    %v332 = vand.u32 %v75, 4294901760
    %333 = vmatmul.mubr.f32.gmra.mrb[0].mxu0 %v332
    %v334 = vpop.f32.mrb[0].mxu0
    %v335 = vadd.f32 %v174, %v334
    %v336 = vpop.f32.mrb[0].mxu0
    %337 = vmatprep.mubr.f32.mxu0 0.0
    %v338 = vand.u32 %v78, 4294901760
    %339 = vmatmul.mubr.f32.gmra.mrb[0].mxu0 %v338
    %v340 = vpop.f32.mrb[0].mxu0
    %v341 = vadd.f32 %v184, %v340
    %v342 = vpop.f32.mrb[0].mxu0
    %343 = vmatprep.mubr.f32.mxu0 0.0
    %v344 = vand.u32 %v81, 4294901760
    %345 = vmatmul.mubr.f32.gmra.mrb[0].mxu0 %v344
    %v346 = vpop.f32.mrb[0].mxu0
    %v347 = vadd.f32 %v194, %v346
    %v348 = vpop.f32.mrb[0].mxu0
    %349 = vmatprep.mubr.f32.mxu0 0.0
    %v350 = vand.u32 %v84, 4294901760
    %351 = vmatmul.mubr.f32.gmra.mrb[0].mxu0 %v350
    %v352 = vpop.f32.mrb[0].mxu0
    %v353 = vadd.f32 %v204, %v352
    %v354 = vpop.f32.mrb[0].mxu0
    %355 = vmatprep.mubr.f32.mxu0 0.0
    %v356 = vand.u32 %v87, 4294901760
    %357 = vmatmul.mubr.f32.gmra.mrb[0].mxu0 %v356
    %v358 = vpop.f32.mrb[0].mxu0
    %v359 = vadd.f32 %v214, %v358
    %v360 = vpop.f32.mrb[0].mxu0
    %361 = vmatprep.mubr.f32.mxu0 0.0
    %v362 = vand.u32 %v90, 4294901760
    %363 = vmatmul.mubr.f32.gmra.mrb[0].mxu0 %v362
    %v364 = vpop.f32.mrb[0].mxu0
    %v365 = vadd.f32 %v224, %v364
    %v366 = vpop.f32.mrb[0].mxu0
    %367 = vmatprep.mubr.f32.mxu0 0.0
    %v368 = vand.u32 %v93, 4294901760
    %369 = vmatmul.mubr.f32.gmra.mrb[0].mxu0 %v368
    %v370 = vpop.f32.mrb[0].mxu0
    %v371 = vadd.f32 %v234, %v370
    %v372 = vpop.f32.mrb[0].mxu0
    %373 = vmatprep.mubr.f32.mxu0 0.0
    %v374 = vand.u32 %v96, 4294901760
    %375 = vmatmul.mubr.f32.gmra.mrb[0].mxu0 %v374
    %v376 = vpop.f32.mrb[0].mxu0
    %v377 = vadd.f32 %v244, %v376
    %v378 = vpop.f32.mrb[0].mxu0
    %379 = vdwg.mxu0
    %380 = vmatprep.subr.mxu0 0.0
    %v381 = vand.u32 %v45, 4294901760
    %v382 = vsub.f32 %v45, %v381
    %383 = vmatpush1.msra.mxu0 %v382
    %384 = vmatprep.subr.mxu0 0.0
    %v385 = vand.u32 %v46, 4294901760
    %v386 = vsub.f32 %v46, %v385
    %387 = vmatpush1.msra.mxu0 %v386
    %388 = vmatprep.subr.mxu0 0.0
    %v389 = vand.u32 %v47, 4294901760
    %v390 = vsub.f32 %v47, %v389
    %391 = vmatpush1.msra.mxu0 %v390
    %392 = vmatprep.subr.mxu0 0.0
    %v393 = vand.u32 %v48, 4294901760
    %v394 = vsub.f32 %v48, %v393
    %395 = vmatpush1.msra.mxu0 %v394
    %396 = vmatprep.subr.mxu0 0.0
    %397 = vmatpush1.msra.mxu0 0.0
    %398 = vmatprep.subr.mxu0 0.0
    %399 = vmatpush1.msra.mxu0 0.0
    %400 = vmatprep.subr.mxu0 0.0
    %401 = vmatpush1.msra.mxu0 0.0
    %402 = vmatprep.subr.mxu0 0.0
    %403 = vmatpush1.msra.mxu0 0.0
    %404 = vmatprep.subr.mxu0 0.0
    %405 = vmatpush1.msra.mxu0 0.0
    %406 = vmatprep.subr.mxu0 0.0
    %407 = vmatpush1.msra.mxu0 0.0
    %408 = vmatprep.subr.mxu0 0.0
    %409 = vmatpush1.msra.mxu0 0.0
    %410 = vmatprep.subr.mxu0 0.0
    %411 = vmatpush1.msra.mxu0 0.0
    %412 = vmatprep.subr.mxu0 0.0
    %413 = vmatpush1.msra.mxu0 0.0
    %414 = vmatprep.subr.mxu0 0.0
    %415 = vmatpush1.msra.mxu0 0.0
    %416 = vmatprep.subr.mxu0 0.0
    %417 = vmatpush1.msra.mxu0 0.0
    %418 = vmatprep.subr.mxu0 0.0
    %419 = vmatpush1.msra.mxu0 0.0
    %420 = vmatprep.subr.mxu0 0.0
    %421 = vmatpush1.msra.mxu0 0.0
    %422 = vmatprep.subr.mxu0 0.0
    %423 = vmatpush1.msra.mxu0 0.0
    %424 = vmatprep.subr.mxu0 0.0
    %425 = vmatpush1.msra.mxu0 0.0
    %426 = vmatprep.subr.mxu0 0.0
    %427 = vmatpush1.msra.mxu0 0.0
    %428 = vmatprep.subr.mxu0 0.0
    %429 = vmatpush1.msra.mxu0 0.0
    %430 = vmatprep.subr.mxu0 0.0
    %431 = vmatpush1.msra.mxu0 0.0
    %432 = vmatprep.subr.mxu0 0.0
    %433 = vmatpush1.msra.mxu0 0.0
    %434 = vmatprep.subr.mxu0 0.0
    %435 = vmatpush1.msra.mxu0 0.0
    %436 = vmatprep.subr.mxu0 0.0
    %437 = vmatpush1.msra.mxu0 0.0
    %438 = vmatprep.subr.mxu0 0.0
    %439 = vmatpush1.msra.mxu0 0.0
    %440 = vmatprep.subr.mxu0 0.0
    %441 = vmatpush1.msra.mxu0 0.0
    %442 = vmatprep.subr.mxu0 0.0
    %443 = vmatpush1.msra.mxu0 0.0
    %444 = vmatprep.subr.mxu0 0.0
    %445 = vmatpush1.msra.mxu0 0.0
    %446 = vmatprep.subr.mxu0 0.0
    %447 = vmatpush1.msra.mxu0 0.0
    %448 = vmatprep.subr.mxu0 0.0
    %449 = vmatpush1.msra.mxu0 0.0
    %450 = vmatprep.subr.mxu0 0.0
    %451 = vmatpush1.msra.mxu0 0.0
    %452 = vmatprep.mubr.f32.mxu0 0.0
    %v453 = vand.u32 %v75, 4294901760
    %v454 = vsub.f32 %v75, %v453
    %455 = vmatmul.mubr.f32.gmra.mrb[0].mxu0 %v454
    %v456 = vpop.f32.mrb[0].mxu0
    %v457 = vadd.f32 %v335, %v456
    %v458 = vpop.f32.mrb[0].mxu0
    %459 = vmatprep.mubr.f32.mxu0 0.0
    %v460 = vand.u32 %v78, 4294901760
    %v461 = vsub.f32 %v78, %v460
    %462 = vmatmul.mubr.f32.gmra.mrb[0].mxu0 %v461
    %v463 = vpop.f32.mrb[0].mxu0
    %v464 = vadd.f32 %v341, %v463
    %v465 = vpop.f32.mrb[0].mxu0
    %466 = vmatprep.mubr.f32.mxu0 0.0
    %v467 = vand.u32 %v81, 4294901760
    %v468 = vsub.f32 %v81, %v467
    %469 = vmatmul.mubr.f32.gmra.mrb[0].mxu0 %v468
    %v470 = vpop.f32.mrb[0].mxu0
    %v471 = vadd.f32 %v347, %v470
    %v472 = vpop.f32.mrb[0].mxu0
    %473 = vmatprep.mubr.f32.mxu0 0.0
    %v474 = vand.u32 %v84, 4294901760
    %v475 = vsub.f32 %v84, %v474
    %476 = vmatmul.mubr.f32.gmra.mrb[0].mxu0 %v475
    %v477 = vpop.f32.mrb[0].mxu0
    %v478 = vadd.f32 %v353, %v477
    %v479 = vpop.f32.mrb[0].mxu0
    %480 = vmatprep.mubr.f32.mxu0 0.0
    %v481 = vand.u32 %v87, 4294901760
    %v482 = vsub.f32 %v87, %v481
    %483 = vmatmul.mubr.f32.gmra.mrb[0].mxu0 %v482
    %v484 = vpop.f32.mrb[0].mxu0
    %v485 = vadd.f32 %v359, %v484
    %v486 = vpop.f32.mrb[0].mxu0
    %487 = vmatprep.mubr.f32.mxu0 0.0
    %v488 = vand.u32 %v90, 4294901760
    %v489 = vsub.f32 %v90, %v488
    %490 = vmatmul.mubr.f32.gmra.mrb[0].mxu0 %v489
    %v491 = vpop.f32.mrb[0].mxu0
    %v492 = vadd.f32 %v365, %v491
    %v493 = vpop.f32.mrb[0].mxu0
    %494 = vmatprep.mubr.f32.mxu0 0.0
    %v495 = vand.u32 %v93, 4294901760
    %v496 = vsub.f32 %v93, %v495
    %497 = vmatmul.mubr.f32.gmra.mrb[0].mxu0 %v496
    %v498 = vpop.f32.mrb[0].mxu0
    %v499 = vadd.f32 %v371, %v498
    %v500 = vpop.f32.mrb[0].mxu0
    %501 = vmatprep.mubr.f32.mxu0 0.0
    %v502 = vand.u32 %v96, 4294901760
    %v503 = vsub.f32 %v96, %v502
    %504 = vmatmul.mubr.f32.gmra.mrb[0].mxu0 %v503
    %v505 = vpop.f32.mrb[0].mxu0
    %v506 = vadd.f32 %v377, %v505
    %v507 = vpop.f32.mrb[0].mxu0
    %508 = vdwg.mxu0
    %509 = vmatprep.subr.mxu0 0.0
    %v510 = vand.u32 %v45, 4294901760
    %511 = vmatpush1.msra.mxu0 %v510
    %512 = vmatprep.subr.mxu0 0.0
    %v513 = vand.u32 %v46, 4294901760
    %514 = vmatpush1.msra.mxu0 %v513
    %515 = vmatprep.subr.mxu0 0.0
    %v516 = vand.u32 %v47, 4294901760
    %517 = vmatpush1.msra.mxu0 %v516
    %518 = vmatprep.subr.mxu0 0.0
    %v519 = vand.u32 %v48, 4294901760
    %520 = vmatpush1.msra.mxu0 %v519
    %521 = vmatprep.subr.mxu0 0.0
    %522 = vmatpush1.msra.mxu0 0.0
    %523 = vmatprep.subr.mxu0 0.0
    %524 = vmatpush1.msra.mxu0 0.0
    %525 = vmatprep.subr.mxu0 0.0
    %526 = vmatpush1.msra.mxu0 0.0
    %527 = vmatprep.subr.mxu0 0.0
    %528 = vmatpush1.msra.mxu0 0.0
    %529 = vmatprep.subr.mxu0 0.0
    %530 = vmatpush1.msra.mxu0 0.0
    %531 = vmatprep.subr.mxu0 0.0
    %532 = vmatpush1.msra.mxu0 0.0
    %533 = vmatprep.subr.mxu0 0.0
    %534 = vmatpush1.msra.mxu0 0.0
    %535 = vmatprep.subr.mxu0 0.0
    %536 = vmatpush1.msra.mxu0 0.0
    %537 = vmatprep.subr.mxu0 0.0
    %538 = vmatpush1.msra.mxu0 0.0
    %539 = vmatprep.subr.mxu0 0.0
    %540 = vmatpush1.msra.mxu0 0.0
    %541 = vmatprep.subr.mxu0 0.0
    %542 = vmatpush1.msra.mxu0 0.0
    %543 = vmatprep.subr.mxu0 0.0
    %544 = vmatpush1.msra.mxu0 0.0
    %545 = vmatprep.subr.mxu0 0.0
    %546 = vmatpush1.msra.mxu0 0.0
    %547 = vmatprep.subr.mxu0 0.0
    %548 = vmatpush1.msra.mxu0 0.0
    %549 = vmatprep.subr.mxu0 0.0
    %550 = vmatpush1.msra.mxu0 0.0
    %551 = vmatprep.subr.mxu0 0.0
    %552 = vmatpush1.msra.mxu0 0.0
    %553 = vmatprep.subr.mxu0 0.0
    %554 = vmatpush1.msra.mxu0 0.0
    %555 = vmatprep.subr.mxu0 0.0
    %556 = vmatpush1.msra.mxu0 0.0
    %557 = vmatprep.subr.mxu0 0.0
    %558 = vmatpush1.msra.mxu0 0.0
    %559 = vmatprep.subr.mxu0 0.0
    %560 = vmatpush1.msra.mxu0 0.0
    %561 = vmatprep.subr.mxu0 0.0
    %562 = vmatpush1.msra.mxu0 0.0
    %563 = vmatprep.subr.mxu0 0.0
    %564 = vmatpush1.msra.mxu0 0.0
    %565 = vmatprep.subr.mxu0 0.0
    %566 = vmatpush1.msra.mxu0 0.0
    %567 = vmatprep.subr.mxu0 0.0
    %568 = vmatpush1.msra.mxu0 0.0
    %569 = vmatprep.subr.mxu0 0.0
    %570 = vmatpush1.msra.mxu0 0.0
    %571 = vmatprep.subr.mxu0 0.0
    %572 = vmatpush1.msra.mxu0 0.0
    %573 = vmatprep.subr.mxu0 0.0
    %574 = vmatpush1.msra.mxu0 0.0
    %575 = vmatprep.subr.mxu0 0.0
    %576 = vmatpush1.msra.mxu0 0.0
    %577 = vmatprep.mubr.f32.mxu0 0.0
    %v578 = vand.u32 %v75, 4294901760
    %v579 = vsub.f32 %v75, %v578
    %v580 = vand.u32 %v579, 4294901760
    %581 = vmatmul.mubr.f32.gmra.mrb[0].mxu0 %v580
    %v582 = vpop.f32.mrb[0].mxu0
    %v583 = vadd.f32 %v457, %v582
    %v584 = vpop.f32.mrb[0].mxu0
    %585 = vmatprep.mubr.f32.mxu0 0.0
    %v586 = vand.u32 %v78, 4294901760
    %v587 = vsub.f32 %v78, %v586
    %v588 = vand.u32 %v587, 4294901760
    %589 = vmatmul.mubr.f32.gmra.mrb[0].mxu0 %v588
    %v590 = vpop.f32.mrb[0].mxu0
    %v591 = vadd.f32 %v464, %v590
    %v592 = vpop.f32.mrb[0].mxu0
    %593 = vmatprep.mubr.f32.mxu0 0.0
    %v594 = vand.u32 %v81, 4294901760
    %v595 = vsub.f32 %v81, %v594
    %v596 = vand.u32 %v595, 4294901760
    %597 = vmatmul.mubr.f32.gmra.mrb[0].mxu0 %v596
    %v598 = vpop.f32.mrb[0].mxu0
    %v599 = vadd.f32 %v471, %v598
    %v600 = vpop.f32.mrb[0].mxu0
    %601 = vmatprep.mubr.f32.mxu0 0.0
    %v602 = vand.u32 %v84, 4294901760
    %v603 = vsub.f32 %v84, %v602
    %v604 = vand.u32 %v603, 4294901760
    %605 = vmatmul.mubr.f32.gmra.mrb[0].mxu0 %v604
    %v606 = vpop.f32.mrb[0].mxu0
    %v607 = vadd.f32 %v478, %v606
    %v608 = vpop.f32.mrb[0].mxu0
    %609 = vmatprep.mubr.f32.mxu0 0.0
    %v610 = vand.u32 %v87, 4294901760
    %v611 = vsub.f32 %v87, %v610
    %v612 = vand.u32 %v611, 4294901760
    %613 = vmatmul.mubr.f32.gmra.mrb[0].mxu0 %v612
    %v614 = vpop.f32.mrb[0].mxu0
    %v615 = vadd.f32 %v485, %v614
    %v616 = vpop.f32.mrb[0].mxu0
    %617 = vmatprep.mubr.f32.mxu0 0.0
    %v618 = vand.u32 %v90, 4294901760
    %v619 = vsub.f32 %v90, %v618
    %v620 = vand.u32 %v619, 4294901760
    %621 = vmatmul.mubr.f32.gmra.mrb[0].mxu0 %v620
    %v622 = vpop.f32.mrb[0].mxu0
    %v623 = vadd.f32 %v492, %v622
    %v624 = vpop.f32.mrb[0].mxu0
    %625 = vmatprep.mubr.f32.mxu0 0.0
    %v626 = vand.u32 %v93, 4294901760
    %v627 = vsub.f32 %v93, %v626
    %v628 = vand.u32 %v627, 4294901760
    %629 = vmatmul.mubr.f32.gmra.mrb[0].mxu0 %v628
    %v630 = vpop.f32.mrb[0].mxu0
    %v631 = vadd.f32 %v499, %v630
    %v632 = vpop.f32.mrb[0].mxu0
    %633 = vmatprep.mubr.f32.mxu0 0.0
    %v634 = vand.u32 %v96, 4294901760
    %v635 = vsub.f32 %v96, %v634
    %v636 = vand.u32 %v635, 4294901760
    %637 = vmatmul.mubr.f32.gmra.mrb[0].mxu0 %v636
    %v638 = vpop.f32.mrb[0].mxu0
    %v639 = vadd.f32 %v506, %v638
    %v640 = vpop.f32.mrb[0].mxu0
    %641 = vdwg.mxu0
    %642 = vmatprep.subr.mxu0 0.0
    %v643 = vand.u32 %v45, 4294901760
    %v644 = vsub.f32 %v45, %v643
    %v645 = vand.u32 %v644, 4294901760
    %646 = vmatpush1.msra.mxu0 %v645
    %647 = vmatprep.subr.mxu0 0.0
    %v648 = vand.u32 %v46, 4294901760
    %v649 = vsub.f32 %v46, %v648
    %v650 = vand.u32 %v649, 4294901760
    %651 = vmatpush1.msra.mxu0 %v650
    %652 = vmatprep.subr.mxu0 0.0
    %v653 = vand.u32 %v47, 4294901760
    %v654 = vsub.f32 %v47, %v653
    %v655 = vand.u32 %v654, 4294901760
    %656 = vmatpush1.msra.mxu0 %v655
    %657 = vmatprep.subr.mxu0 0.0
    %v658 = vand.u32 %v48, 4294901760
    %v659 = vsub.f32 %v48, %v658
    %v660 = vand.u32 %v659, 4294901760
    %661 = vmatpush1.msra.mxu0 %v660
    %662 = vmatprep.subr.mxu0 0.0
    %663 = vmatpush1.msra.mxu0 0.0
    %664 = vmatprep.subr.mxu0 0.0
    %665 = vmatpush1.msra.mxu0 0.0
    %666 = vmatprep.subr.mxu0 0.0
    %667 = vmatpush1.msra.mxu0 0.0
    %668 = vmatprep.subr.mxu0 0.0
    %669 = vmatpush1.msra.mxu0 0.0
    %670 = vmatprep.subr.mxu0 0.0
    %671 = vmatpush1.msra.mxu0 0.0
    %672 = vmatprep.subr.mxu0 0.0
    %673 = vmatpush1.msra.mxu0 0.0
    %674 = vmatprep.subr.mxu0 0.0
    %675 = vmatpush1.msra.mxu0 0.0
    %676 = vmatprep.subr.mxu0 0.0
    %677 = vmatpush1.msra.mxu0 0.0
    %678 = vmatprep.subr.mxu0 0.0
    %679 = vmatpush1.msra.mxu0 0.0
    %680 = vmatprep.subr.mxu0 0.0
    %681 = vmatpush1.msra.mxu0 0.0
    %682 = vmatprep.subr.mxu0 0.0
    %683 = vmatpush1.msra.mxu0 0.0
    %684 = vmatprep.subr.mxu0 0.0
    %685 = vmatpush1.msra.mxu0 0.0
    %686 = vmatprep.subr.mxu0 0.0
    %687 = vmatpush1.msra.mxu0 0.0
    %688 = vmatprep.subr.mxu0 0.0
    %689 = vmatpush1.msra.mxu0 0.0
    %690 = vmatprep.subr.mxu0 0.0
    %691 = vmatpush1.msra.mxu0 0.0
    %692 = vmatprep.subr.mxu0 0.0
    %693 = vmatpush1.msra.mxu0 0.0
    %694 = vmatprep.subr.mxu0 0.0
    %695 = vmatpush1.msra.mxu0 0.0
    %696 = vmatprep.subr.mxu0 0.0
    %697 = vmatpush1.msra.mxu0 0.0
    %698 = vmatprep.subr.mxu0 0.0
    %699 = vmatpush1.msra.mxu0 0.0
    %700 = vmatprep.subr.mxu0 0.0
    %701 = vmatpush1.msra.mxu0 0.0
    %702 = vmatprep.subr.mxu0 0.0
    %703 = vmatpush1.msra.mxu0 0.0
    %704 = vmatprep.subr.mxu0 0.0
    %705 = vmatpush1.msra.mxu0 0.0
    %706 = vmatprep.subr.mxu0 0.0
    %707 = vmatpush1.msra.mxu0 0.0
    %708 = vmatprep.subr.mxu0 0.0
    %709 = vmatpush1.msra.mxu0 0.0
    %710 = vmatprep.subr.mxu0 0.0
    %711 = vmatpush1.msra.mxu0 0.0
    %712 = vmatprep.subr.mxu0 0.0
    %713 = vmatpush1.msra.mxu0 0.0
    %714 = vmatprep.subr.mxu0 0.0
    %715 = vmatpush1.msra.mxu0 0.0
    %716 = vmatprep.subr.mxu0 0.0
    %717 = vmatpush1.msra.mxu0 0.0
    %718 = vmatprep.mubr.f32.mxu0 0.0
    %v719 = vand.u32 %v75, 4294901760
    %720 = vmatmul.mubr.f32.gmra.mrb[0].mxu0 %v719
    %v721 = vpop.f32.mrb[0].mxu0
    %v722 = vadd.f32 %v583, %v721
    %v723 = vpop.f32.mrb[0].mxu0
    %724 = vmatprep.mubr.f32.mxu0 0.0
    %v725 = vand.u32 %v78, 4294901760
    %726 = vmatmul.mubr.f32.gmra.mrb[0].mxu0 %v725
    %v727 = vpop.f32.mrb[0].mxu0
    %v728 = vadd.f32 %v591, %v727
    %v729 = vpop.f32.mrb[0].mxu0
    %730 = vmatprep.mubr.f32.mxu0 0.0
    %v731 = vand.u32 %v81, 4294901760
    %732 = vmatmul.mubr.f32.gmra.mrb[0].mxu0 %v731
    %v733 = vpop.f32.mrb[0].mxu0
    %v734 = vadd.f32 %v599, %v733
    %v735 = vpop.f32.mrb[0].mxu0
    %736 = vmatprep.mubr.f32.mxu0 0.0
    %v737 = vand.u32 %v84, 4294901760
    %738 = vmatmul.mubr.f32.gmra.mrb[0].mxu0 %v737
    %v739 = vpop.f32.mrb[0].mxu0
    %v740 = vadd.f32 %v607, %v739
    %v741 = vpop.f32.mrb[0].mxu0
    %742 = vmatprep.mubr.f32.mxu0 0.0
    %v743 = vand.u32 %v87, 4294901760
    %744 = vmatmul.mubr.f32.gmra.mrb[0].mxu0 %v743
    %v745 = vpop.f32.mrb[0].mxu0
    %v746 = vadd.f32 %v615, %v745
    %v747 = vpop.f32.mrb[0].mxu0
    %748 = vmatprep.mubr.f32.mxu0 0.0
    %v749 = vand.u32 %v90, 4294901760
    %750 = vmatmul.mubr.f32.gmra.mrb[0].mxu0 %v749
    %v751 = vpop.f32.mrb[0].mxu0
    %v752 = vadd.f32 %v623, %v751
    %v753 = vpop.f32.mrb[0].mxu0
    %754 = vmatprep.mubr.f32.mxu0 0.0
    %v755 = vand.u32 %v93, 4294901760
    %756 = vmatmul.mubr.f32.gmra.mrb[0].mxu0 %v755
    %v757 = vpop.f32.mrb[0].mxu0
    %v758 = vadd.f32 %v631, %v757
    %v759 = vpop.f32.mrb[0].mxu0
    %760 = vmatprep.mubr.f32.mxu0 0.0
    %v761 = vand.u32 %v96, 4294901760
    %762 = vmatmul.mubr.f32.gmra.mrb[0].mxu0 %v761
    %v763 = vpop.f32.mrb[0].mxu0
    %v764 = vadd.f32 %v639, %v763
    %v765 = vpop.f32.mrb[0].mxu0
    %766 = vdwg.mxu0
    %767 = vmatprep.subr.mxu0 0.0
    %v768 = vand.u32 %v45, 4294901760
    %769 = vmatpush1.msra.mxu0 %v768
    %770 = vmatprep.subr.mxu0 0.0
    %v771 = vand.u32 %v46, 4294901760
    %772 = vmatpush1.msra.mxu0 %v771
    %773 = vmatprep.subr.mxu0 0.0
    %v774 = vand.u32 %v47, 4294901760
    %775 = vmatpush1.msra.mxu0 %v774
    %776 = vmatprep.subr.mxu0 0.0
    %v777 = vand.u32 %v48, 4294901760
    %778 = vmatpush1.msra.mxu0 %v777
    %779 = vmatprep.subr.mxu0 0.0
    %780 = vmatpush1.msra.mxu0 0.0
    %781 = vmatprep.subr.mxu0 0.0
    %782 = vmatpush1.msra.mxu0 0.0
    %783 = vmatprep.subr.mxu0 0.0
    %784 = vmatpush1.msra.mxu0 0.0
    %785 = vmatprep.subr.mxu0 0.0
    %786 = vmatpush1.msra.mxu0 0.0
    %787 = vmatprep.subr.mxu0 0.0
    %788 = vmatpush1.msra.mxu0 0.0
    %789 = vmatprep.subr.mxu0 0.0
    %790 = vmatpush1.msra.mxu0 0.0
    %791 = vmatprep.subr.mxu0 0.0
    %792 = vmatpush1.msra.mxu0 0.0
    %793 = vmatprep.subr.mxu0 0.0
    %794 = vmatpush1.msra.mxu0 0.0
    %795 = vmatprep.subr.mxu0 0.0
    %796 = vmatpush1.msra.mxu0 0.0
    %797 = vmatprep.subr.mxu0 0.0
    %798 = vmatpush1.msra.mxu0 0.0
    %799 = vmatprep.subr.mxu0 0.0
    %800 = vmatpush1.msra.mxu0 0.0
    %801 = vmatprep.subr.mxu0 0.0
    %802 = vmatpush1.msra.mxu0 0.0
    %803 = vmatprep.subr.mxu0 0.0
    %804 = vmatpush1.msra.mxu0 0.0
    %805 = vmatprep.subr.mxu0 0.0
    %806 = vmatpush1.msra.mxu0 0.0
    %807 = vmatprep.subr.mxu0 0.0
    %808 = vmatpush1.msra.mxu0 0.0
    %809 = vmatprep.subr.mxu0 0.0
    %810 = vmatpush1.msra.mxu0 0.0
    %811 = vmatprep.subr.mxu0 0.0
    %812 = vmatpush1.msra.mxu0 0.0
    %813 = vmatprep.subr.mxu0 0.0
    %814 = vmatpush1.msra.mxu0 0.0
    %815 = vmatprep.subr.mxu0 0.0
    %816 = vmatpush1.msra.mxu0 0.0
    %817 = vmatprep.subr.mxu0 0.0
    %818 = vmatpush1.msra.mxu0 0.0
    %819 = vmatprep.subr.mxu0 0.0
    %820 = vmatpush1.msra.mxu0 0.0
    %821 = vmatprep.subr.mxu0 0.0
    %822 = vmatpush1.msra.mxu0 0.0
    %823 = vmatprep.subr.mxu0 0.0
    %824 = vmatpush1.msra.mxu0 0.0
    %825 = vmatprep.subr.mxu0 0.0
    %826 = vmatpush1.msra.mxu0 0.0
    %827 = vmatprep.subr.mxu0 0.0
    %828 = vmatpush1.msra.mxu0 0.0
    %829 = vmatprep.subr.mxu0 0.0
    %830 = vmatpush1.msra.mxu0 0.0
    %831 = vmatprep.subr.mxu0 0.0
    %832 = vmatpush1.msra.mxu0 0.0
    %833 = vmatprep.subr.mxu0 0.0
    %834 = vmatpush1.msra.mxu0 0.0
    %835 = vmatprep.mubr.f32.mxu0 0.0
    %v836 = vand.u32 %v75, 4294901760
    %837 = vmatmul.mubr.f32.gmra.mrb[0].mxu0 %v836
    %v838 = vpop.f32.mrb[0].mxu0
    %v839 = vadd.f32 %v722, %v838
    %v840 = vpop.f32.mrb[0].mxu0
    %841 = vmatprep.mubr.f32.mxu0 0.0
    %v842 = vand.u32 %v78, 4294901760
    %843 = vmatmul.mubr.f32.gmra.mrb[0].mxu0 %v842
    %v844 = vpop.f32.mrb[0].mxu0
    %v845 = vadd.f32 %v728, %v844
    %v846 = vpop.f32.mrb[0].mxu0
    %847 = vmatprep.mubr.f32.mxu0 0.0
    %v848 = vand.u32 %v81, 4294901760
    %849 = vmatmul.mubr.f32.gmra.mrb[0].mxu0 %v848
    %v850 = vpop.f32.mrb[0].mxu0
    %v851 = vadd.f32 %v734, %v850
    %v852 = vpop.f32.mrb[0].mxu0
    %853 = vmatprep.mubr.f32.mxu0 0.0
    %v854 = vand.u32 %v84, 4294901760
    %855 = vmatmul.mubr.f32.gmra.mrb[0].mxu0 %v854
    %v856 = vpop.f32.mrb[0].mxu0
    %v857 = vadd.f32 %v740, %v856
    %v858 = vpop.f32.mrb[0].mxu0
    %859 = vmatprep.mubr.f32.mxu0 0.0
    %v860 = vand.u32 %v87, 4294901760
    %861 = vmatmul.mubr.f32.gmra.mrb[0].mxu0 %v860
    %v862 = vpop.f32.mrb[0].mxu0
    %v863 = vadd.f32 %v746, %v862
    %v864 = vpop.f32.mrb[0].mxu0
    %865 = vmatprep.mubr.f32.mxu0 0.0
    %v866 = vand.u32 %v90, 4294901760
    %867 = vmatmul.mubr.f32.gmra.mrb[0].mxu0 %v866
    %v868 = vpop.f32.mrb[0].mxu0
    %v869 = vadd.f32 %v752, %v868
    %v870 = vpop.f32.mrb[0].mxu0
    %871 = vmatprep.mubr.f32.mxu0 0.0
    %v872 = vand.u32 %v93, 4294901760
    %873 = vmatmul.mubr.f32.gmra.mrb[0].mxu0 %v872
    %v874 = vpop.f32.mrb[0].mxu0
    %v875 = vadd.f32 %v758, %v874
    %v876 = vpop.f32.mrb[0].mxu0
    %877 = vmatprep.mubr.f32.mxu0 0.0
    %v878 = vand.u32 %v96, 4294901760
    %879 = vmatmul.mubr.f32.gmra.mrb[0].mxu0 %v878
    %v880 = vpop.f32.mrb[0].mxu0
    %v881 = vadd.f32 %v764, %v880
    %v882 = vpop.f32.mrb[0].mxu0
    %883 = vdwg.mxu0
    %v884 = vld [vmem:[%s3] sm:$0xff]
    %v885 = vld [vmem:[%s3 + $0x8] sm:$0xff]
    %v886 = vld [vmem:[%s3 + $0x10] sm:$0xff]
    %v887 = vld [vmem:[%s3 + $0x18] sm:$0xff]
    %v888 = vld [vmem:[%s3 + $0x20] sm:$0xff]
    %v889 = vld [vmem:[%s3 + $0x28] sm:$0xff]
    %v890 = vld [vmem:[%s3 + $0x30] sm:$0xff]
    %v891 = vld [vmem:[%s3 + $0x38] sm:$0xff]
    %v893 = vsel %vm73, %v884, 0
    %v896 = vsel %vm73, %v885, 0
    %v899 = vsel %vm73, %v886, 0
    %v902 = vsel %vm73, %v887, 0
    %v905 = vsel %vm73, %v888, 0
    %v908 = vsel %vm73, %v889, 0
    %v911 = vsel %vm73, %v890, 0
    %v914 = vsel %vm73, %v891, 0
    %916 = vmatprep.subr.mxu0 0.0
    %v917 = vand.u32 %v61, 4294901760
    %918 = vmatpush1.msra.mxu0 %v917
    %919 = vmatprep.subr.mxu0 0.0
    %v920 = vand.u32 %v62, 4294901760
    %921 = vmatpush1.msra.mxu0 %v920
    %922 = vmatprep.subr.mxu0 0.0
    %v923 = vand.u32 %v63, 4294901760
    %924 = vmatpush1.msra.mxu0 %v923
    %925 = vmatprep.subr.mxu0 0.0
    %v926 = vand.u32 %v64, 4294901760
    %927 = vmatpush1.msra.mxu0 %v926
    %928 = vmatprep.subr.mxu0 0.0
    %929 = vmatpush1.msra.mxu0 0.0
    %930 = vmatprep.subr.mxu0 0.0
    %931 = vmatpush1.msra.mxu0 0.0
    %932 = vmatprep.subr.mxu0 0.0
    %933 = vmatpush1.msra.mxu0 0.0
    %934 = vmatprep.subr.mxu0 0.0
    %935 = vmatpush1.msra.mxu0 0.0
    %936 = vmatprep.subr.mxu0 0.0
    %937 = vmatpush1.msra.mxu0 0.0
    %938 = vmatprep.subr.mxu0 0.0
    %939 = vmatpush1.msra.mxu0 0.0
    %940 = vmatprep.subr.mxu0 0.0
    %941 = vmatpush1.msra.mxu0 0.0
    %942 = vmatprep.subr.mxu0 0.0
    %943 = vmatpush1.msra.mxu0 0.0
    %944 = vmatprep.subr.mxu0 0.0
    %945 = vmatpush1.msra.mxu0 0.0
    %946 = vmatprep.subr.mxu0 0.0
    %947 = vmatpush1.msra.mxu0 0.0
    %948 = vmatprep.subr.mxu0 0.0
    %949 = vmatpush1.msra.mxu0 0.0
    %950 = vmatprep.subr.mxu0 0.0
    %951 = vmatpush1.msra.mxu0 0.0
    %952 = vmatprep.subr.mxu0 0.0
    %953 = vmatpush1.msra.mxu0 0.0
    %954 = vmatprep.subr.mxu0 0.0
    %955 = vmatpush1.msra.mxu0 0.0
    %956 = vmatprep.subr.mxu0 0.0
    %957 = vmatpush1.msra.mxu0 0.0
    %958 = vmatprep.subr.mxu0 0.0
    %959 = vmatpush1.msra.mxu0 0.0
    %960 = vmatprep.subr.mxu0 0.0
    %961 = vmatpush1.msra.mxu0 0.0
    %962 = vmatprep.subr.mxu0 0.0
    %963 = vmatpush1.msra.mxu0 0.0
    %964 = vmatprep.subr.mxu0 0.0
    %965 = vmatpush1.msra.mxu0 0.0
    %966 = vmatprep.subr.mxu0 0.0
    %967 = vmatpush1.msra.mxu0 0.0
    %968 = vmatprep.subr.mxu0 0.0
    %969 = vmatpush1.msra.mxu0 0.0
    %970 = vmatprep.subr.mxu0 0.0
    %971 = vmatpush1.msra.mxu0 0.0
    %972 = vmatprep.subr.mxu0 0.0
    %973 = vmatpush1.msra.mxu0 0.0
    %974 = vmatprep.subr.mxu0 0.0
    %975 = vmatpush1.msra.mxu0 0.0
    %976 = vmatprep.subr.mxu0 0.0
    %977 = vmatpush1.msra.mxu0 0.0
    %978 = vmatprep.subr.mxu0 0.0
    %979 = vmatpush1.msra.mxu0 0.0
    %980 = vmatprep.subr.mxu0 0.0
    %981 = vmatpush1.msra.mxu0 0.0
    %982 = vmatprep.subr.mxu0 0.0
    %983 = vmatpush1.msra.mxu0 0.0
    %984 = vmatprep.mubr.f32.mxu0 0.0
    %v985 = vand.u32 %v893, 4294901760
    %v986 = vsub.f32 %v893, %v985
    %v987 = vand.u32 %v986, 4294901760
    %v988 = vsub.f32 %v986, %v987
    %v989 = vand.u32 %v988, 4294901760
    %990 = vmatmul.mubr.f32.gmra.mrb[0].mxu0 %v989
    %v991 = vpop.f32.mrb[0].mxu0
    %v992 = vadd.f32 0.0, %v991
    %v993 = vpop.f32.mrb[0].mxu0
    %994 = vmatprep.mubr.f32.mxu0 0.0
    %v995 = vand.u32 %v896, 4294901760
    %v996 = vsub.f32 %v896, %v995
    %v997 = vand.u32 %v996, 4294901760
    %v998 = vsub.f32 %v996, %v997
    %v999 = vand.u32 %v998, 4294901760
    %1000 = vmatmul.mubr.f32.gmra.mrb[0].mxu0 %v999
    %v1001 = vpop.f32.mrb[0].mxu0
    %v1002 = vadd.f32 0.0, %v1001
    %v1003 = vpop.f32.mrb[0].mxu0
    %1004 = vmatprep.mubr.f32.mxu0 0.0
    %v1005 = vand.u32 %v899, 4294901760
    %v1006 = vsub.f32 %v899, %v1005
    %v1007 = vand.u32 %v1006, 4294901760
    %v1008 = vsub.f32 %v1006, %v1007
    %v1009 = vand.u32 %v1008, 4294901760
    %1010 = vmatmul.mubr.f32.gmra.mrb[0].mxu0 %v1009
    %v1011 = vpop.f32.mrb[0].mxu0
    %v1012 = vadd.f32 0.0, %v1011
    %v1013 = vpop.f32.mrb[0].mxu0
    %1014 = vmatprep.mubr.f32.mxu0 0.0
    %v1015 = vand.u32 %v902, 4294901760
    %v1016 = vsub.f32 %v902, %v1015
    %v1017 = vand.u32 %v1016, 4294901760
    %v1018 = vsub.f32 %v1016, %v1017
    %v1019 = vand.u32 %v1018, 4294901760
    %1020 = vmatmul.mubr.f32.gmra.mrb[0].mxu0 %v1019
    %v1021 = vpop.f32.mrb[0].mxu0
    %v1022 = vadd.f32 0.0, %v1021
    %v1023 = vpop.f32.mrb[0].mxu0
    %1024 = vmatprep.mubr.f32.mxu0 0.0
    %v1025 = vand.u32 %v905, 4294901760
    %v1026 = vsub.f32 %v905, %v1025
    %v1027 = vand.u32 %v1026, 4294901760
    %v1028 = vsub.f32 %v1026, %v1027
    %v1029 = vand.u32 %v1028, 4294901760
    %1030 = vmatmul.mubr.f32.gmra.mrb[0].mxu0 %v1029
    %v1031 = vpop.f32.mrb[0].mxu0
    %v1032 = vadd.f32 0.0, %v1031
    %v1033 = vpop.f32.mrb[0].mxu0
    %1034 = vmatprep.mubr.f32.mxu0 0.0
    %v1035 = vand.u32 %v908, 4294901760
    %v1036 = vsub.f32 %v908, %v1035
    %v1037 = vand.u32 %v1036, 4294901760
    %v1038 = vsub.f32 %v1036, %v1037
    %v1039 = vand.u32 %v1038, 4294901760
    %1040 = vmatmul.mubr.f32.gmra.mrb[0].mxu0 %v1039
    %v1041 = vpop.f32.mrb[0].mxu0
    %v1042 = vadd.f32 0.0, %v1041
    %v1043 = vpop.f32.mrb[0].mxu0
    %1044 = vmatprep.mubr.f32.mxu0 0.0
    %v1045 = vand.u32 %v911, 4294901760
    %v1046 = vsub.f32 %v911, %v1045
    %v1047 = vand.u32 %v1046, 4294901760
    %v1048 = vsub.f32 %v1046, %v1047
    %v1049 = vand.u32 %v1048, 4294901760
    %1050 = vmatmul.mubr.f32.gmra.mrb[0].mxu0 %v1049
    %v1051 = vpop.f32.mrb[0].mxu0
    %v1052 = vadd.f32 0.0, %v1051
    %v1053 = vpop.f32.mrb[0].mxu0
    %1054 = vmatprep.mubr.f32.mxu0 0.0
    %v1055 = vand.u32 %v914, 4294901760
    %v1056 = vsub.f32 %v914, %v1055
    %v1057 = vand.u32 %v1056, 4294901760
    %v1058 = vsub.f32 %v1056, %v1057
    %v1059 = vand.u32 %v1058, 4294901760
    %1060 = vmatmul.mubr.f32.gmra.mrb[0].mxu0 %v1059
    %v1061 = vpop.f32.mrb[0].mxu0
    %v1062 = vadd.f32 0.0, %v1061
    %v1063 = vpop.f32.mrb[0].mxu0
    %1064 = vdwg.mxu0
    %1065 = vmatprep.subr.mxu0 0.0
    %v1066 = vand.u32 %v61, 4294901760
    %v1067 = vsub.f32 %v61, %v1066
    %v1068 = vand.u32 %v1067, 4294901760
    %v1069 = vsub.f32 %v1067, %v1068
    %v1070 = vand.u32 %v1069, 4294901760
    %1071 = vmatpush1.msra.mxu0 %v1070
    %1072 = vmatprep.subr.mxu0 0.0
    %v1073 = vand.u32 %v62, 4294901760
    %v1074 = vsub.f32 %v62, %v1073
    %v1075 = vand.u32 %v1074, 4294901760
    %v1076 = vsub.f32 %v1074, %v1075
    %v1077 = vand.u32 %v1076, 4294901760
    %1078 = vmatpush1.msra.mxu0 %v1077
    %1079 = vmatprep.subr.mxu0 0.0
    %v1080 = vand.u32 %v63, 4294901760
    %v1081 = vsub.f32 %v63, %v1080
    %v1082 = vand.u32 %v1081, 4294901760
    %v1083 = vsub.f32 %v1081, %v1082
    %v1084 = vand.u32 %v1083, 4294901760
    %1085 = vmatpush1.msra.mxu0 %v1084
    %1086 = vmatprep.subr.mxu0 0.0
    %v1087 = vand.u32 %v64, 4294901760
    %v1088 = vsub.f32 %v64, %v1087
    %v1089 = vand.u32 %v1088, 4294901760
    %v1090 = vsub.f32 %v1088, %v1089
    %v1091 = vand.u32 %v1090, 4294901760
    %1092 = vmatpush1.msra.mxu0 %v1091
    %1093 = vmatprep.subr.mxu0 0.0
    %1094 = vmatpush1.msra.mxu0 0.0
    %1095 = vmatprep.subr.mxu0 0.0
    %1096 = vmatpush1.msra.mxu0 0.0
    %1097 = vmatprep.subr.mxu0 0.0
    %1098 = vmatpush1.msra.mxu0 0.0
    %1099 = vmatprep.subr.mxu0 0.0
    %1100 = vmatpush1.msra.mxu0 0.0
    %1101 = vmatprep.subr.mxu0 0.0
    %1102 = vmatpush1.msra.mxu0 0.0
    %1103 = vmatprep.subr.mxu0 0.0
    %1104 = vmatpush1.msra.mxu0 0.0
    %1105 = vmatprep.subr.mxu0 0.0
    %1106 = vmatpush1.msra.mxu0 0.0
    %1107 = vmatprep.subr.mxu0 0.0
    %1108 = vmatpush1.msra.mxu0 0.0
    %1109 = vmatprep.subr.mxu0 0.0
    %1110 = vmatpush1.msra.mxu0 0.0
    %1111 = vmatprep.subr.mxu0 0.0
    %1112 = vmatpush1.msra.mxu0 0.0
    %1113 = vmatprep.subr.mxu0 0.0
    %1114 = vmatpush1.msra.mxu0 0.0
    %1115 = vmatprep.subr.mxu0 0.0
    %1116 = vmatpush1.msra.mxu0 0.0
    %1117 = vmatprep.subr.mxu0 0.0
    %1118 = vmatpush1.msra.mxu0 0.0
    %1119 = vmatprep.subr.mxu0 0.0
    %1120 = vmatpush1.msra.mxu0 0.0
    %1121 = vmatprep.subr.mxu0 0.0
    %1122 = vmatpush1.msra.mxu0 0.0
    %1123 = vmatprep.subr.mxu0 0.0
    %1124 = vmatpush1.msra.mxu0 0.0
    %1125 = vmatprep.subr.mxu0 0.0
    %1126 = vmatpush1.msra.mxu0 0.0
    %1127 = vmatprep.subr.mxu0 0.0
    %1128 = vmatpush1.msra.mxu0 0.0
    %1129 = vmatprep.subr.mxu0 0.0
    %1130 = vmatpush1.msra.mxu0 0.0
    %1131 = vmatprep.subr.mxu0 0.0
    %1132 = vmatpush1.msra.mxu0 0.0
    %1133 = vmatprep.subr.mxu0 0.0
    %1134 = vmatpush1.msra.mxu0 0.0
    %1135 = vmatprep.subr.mxu0 0.0
    %1136 = vmatpush1.msra.mxu0 0.0
    %1137 = vmatprep.subr.mxu0 0.0
    %1138 = vmatpush1.msra.mxu0 0.0
    %1139 = vmatprep.subr.mxu0 0.0
    %1140 = vmatpush1.msra.mxu0 0.0
    %1141 = vmatprep.subr.mxu0 0.0
    %1142 = vmatpush1.msra.mxu0 0.0
    %1143 = vmatprep.subr.mxu0 0.0
    %1144 = vmatpush1.msra.mxu0 0.0
    %1145 = vmatprep.subr.mxu0 0.0
    %1146 = vmatpush1.msra.mxu0 0.0
    %1147 = vmatprep.subr.mxu0 0.0
    %1148 = vmatpush1.msra.mxu0 0.0
    %1149 = vmatprep.mubr.f32.mxu0 0.0
    %v1150 = vand.u32 %v893, 4294901760
    %1151 = vmatmul.mubr.f32.gmra.mrb[0].mxu0 %v1150
    %v1152 = vpop.f32.mrb[0].mxu0
    %v1153 = vadd.f32 %v992, %v1152
    %v1154 = vpop.f32.mrb[0].mxu0
    %1155 = vmatprep.mubr.f32.mxu0 0.0
    %v1156 = vand.u32 %v896, 4294901760
    %1157 = vmatmul.mubr.f32.gmra.mrb[0].mxu0 %v1156
    %v1158 = vpop.f32.mrb[0].mxu0
    %v1159 = vadd.f32 %v1002, %v1158
    %v1160 = vpop.f32.mrb[0].mxu0
    %1161 = vmatprep.mubr.f32.mxu0 0.0
    %v1162 = vand.u32 %v899, 4294901760
    %1163 = vmatmul.mubr.f32.gmra.mrb[0].mxu0 %v1162
    %v1164 = vpop.f32.mrb[0].mxu0
    %v1165 = vadd.f32 %v1012, %v1164
    %v1166 = vpop.f32.mrb[0].mxu0
    %1167 = vmatprep.mubr.f32.mxu0 0.0
    %v1168 = vand.u32 %v902, 4294901760
    %1169 = vmatmul.mubr.f32.gmra.mrb[0].mxu0 %v1168
    %v1170 = vpop.f32.mrb[0].mxu0
    %v1171 = vadd.f32 %v1022, %v1170
    %v1172 = vpop.f32.mrb[0].mxu0
    %1173 = vmatprep.mubr.f32.mxu0 0.0
    %v1174 = vand.u32 %v905, 4294901760
    %1175 = vmatmul.mubr.f32.gmra.mrb[0].mxu0 %v1174
    %v1176 = vpop.f32.mrb[0].mxu0
    %v1177 = vadd.f32 %v1032, %v1176
    %v1178 = vpop.f32.mrb[0].mxu0
    %1179 = vmatprep.mubr.f32.mxu0 0.0
    %v1180 = vand.u32 %v908, 4294901760
    %1181 = vmatmul.mubr.f32.gmra.mrb[0].mxu0 %v1180
    %v1182 = vpop.f32.mrb[0].mxu0
    %v1183 = vadd.f32 %v1042, %v1182
    %v1184 = vpop.f32.mrb[0].mxu0
    %1185 = vmatprep.mubr.f32.mxu0 0.0
    %v1186 = vand.u32 %v911, 4294901760
    %1187 = vmatmul.mubr.f32.gmra.mrb[0].mxu0 %v1186
    %v1188 = vpop.f32.mrb[0].mxu0
    %v1189 = vadd.f32 %v1052, %v1188
    %v1190 = vpop.f32.mrb[0].mxu0
    %1191 = vmatprep.mubr.f32.mxu0 0.0
    %v1192 = vand.u32 %v914, 4294901760
    %1193 = vmatmul.mubr.f32.gmra.mrb[0].mxu0 %v1192
    %v1194 = vpop.f32.mrb[0].mxu0
    %v1195 = vadd.f32 %v1062, %v1194
    %v1196 = vpop.f32.mrb[0].mxu0
    %1197 = vdwg.mxu0
    %1198 = vmatprep.subr.mxu0 0.0
    %v1199 = vand.u32 %v61, 4294901760
    %v1200 = vsub.f32 %v61, %v1199
    %1201 = vmatpush1.msra.mxu0 %v1200
    %1202 = vmatprep.subr.mxu0 0.0
    %v1203 = vand.u32 %v62, 4294901760
    %v1204 = vsub.f32 %v62, %v1203
    %1205 = vmatpush1.msra.mxu0 %v1204
    %1206 = vmatprep.subr.mxu0 0.0
    %v1207 = vand.u32 %v63, 4294901760
    %v1208 = vsub.f32 %v63, %v1207
    %1209 = vmatpush1.msra.mxu0 %v1208
    %1210 = vmatprep.subr.mxu0 0.0
    %v1211 = vand.u32 %v64, 4294901760
    %v1212 = vsub.f32 %v64, %v1211
    %1213 = vmatpush1.msra.mxu0 %v1212
    %1214 = vmatprep.subr.mxu0 0.0
    %1215 = vmatpush1.msra.mxu0 0.0
    %1216 = vmatprep.subr.mxu0 0.0
    %1217 = vmatpush1.msra.mxu0 0.0
    %1218 = vmatprep.subr.mxu0 0.0
    %1219 = vmatpush1.msra.mxu0 0.0
    %1220 = vmatprep.subr.mxu0 0.0
    %1221 = vmatpush1.msra.mxu0 0.0
    %1222 = vmatprep.subr.mxu0 0.0
    %1223 = vmatpush1.msra.mxu0 0.0
    %1224 = vmatprep.subr.mxu0 0.0
    %1225 = vmatpush1.msra.mxu0 0.0
    %1226 = vmatprep.subr.mxu0 0.0
    %1227 = vmatpush1.msra.mxu0 0.0
    %1228 = vmatprep.subr.mxu0 0.0
    %1229 = vmatpush1.msra.mxu0 0.0
    %1230 = vmatprep.subr.mxu0 0.0
    %1231 = vmatpush1.msra.mxu0 0.0
    %1232 = vmatprep.subr.mxu0 0.0
    %1233 = vmatpush1.msra.mxu0 0.0
    %1234 = vmatprep.subr.mxu0 0.0
    %1235 = vmatpush1.msra.mxu0 0.0
    %1236 = vmatprep.subr.mxu0 0.0
    %1237 = vmatpush1.msra.mxu0 0.0
    %1238 = vmatprep.subr.mxu0 0.0
    %1239 = vmatpush1.msra.mxu0 0.0
    %1240 = vmatprep.subr.mxu0 0.0
    %1241 = vmatpush1.msra.mxu0 0.0
    %1242 = vmatprep.subr.mxu0 0.0
    %1243 = vmatpush1.msra.mxu0 0.0
    %1244 = vmatprep.subr.mxu0 0.0
    %1245 = vmatpush1.msra.mxu0 0.0
    %1246 = vmatprep.subr.mxu0 0.0
    %1247 = vmatpush1.msra.mxu0 0.0
    %1248 = vmatprep.subr.mxu0 0.0
    %1249 = vmatpush1.msra.mxu0 0.0
    %1250 = vmatprep.subr.mxu0 0.0
    %1251 = vmatpush1.msra.mxu0 0.0
    %1252 = vmatprep.subr.mxu0 0.0
    %1253 = vmatpush1.msra.mxu0 0.0
    %1254 = vmatprep.subr.mxu0 0.0
    %1255 = vmatpush1.msra.mxu0 0.0
    %1256 = vmatprep.subr.mxu0 0.0
    %1257 = vmatpush1.msra.mxu0 0.0
    %1258 = vmatprep.subr.mxu0 0.0
    %1259 = vmatpush1.msra.mxu0 0.0
    %1260 = vmatprep.subr.mxu0 0.0
    %1261 = vmatpush1.msra.mxu0 0.0
    %1262 = vmatprep.subr.mxu0 0.0
    %1263 = vmatpush1.msra.mxu0 0.0
    %1264 = vmatprep.subr.mxu0 0.0
    %1265 = vmatpush1.msra.mxu0 0.0
    %1266 = vmatprep.subr.mxu0 0.0
    %1267 = vmatpush1.msra.mxu0 0.0
    %1268 = vmatprep.subr.mxu0 0.0
    %1269 = vmatpush1.msra.mxu0 0.0
    %1270 = vmatprep.mubr.f32.mxu0 0.0
    %v1271 = vand.u32 %v893, 4294901760
    %v1272 = vsub.f32 %v893, %v1271
    %1273 = vmatmul.mubr.f32.gmra.mrb[0].mxu0 %v1272
    %v1274 = vpop.f32.mrb[0].mxu0
    %v1275 = vadd.f32 %v1153, %v1274
    %v1276 = vpop.f32.mrb[0].mxu0
    %1277 = vmatprep.mubr.f32.mxu0 0.0
    %v1278 = vand.u32 %v896, 4294901760
    %v1279 = vsub.f32 %v896, %v1278
    %1280 = vmatmul.mubr.f32.gmra.mrb[0].mxu0 %v1279
    %v1281 = vpop.f32.mrb[0].mxu0
    %v1282 = vadd.f32 %v1159, %v1281
    %v1283 = vpop.f32.mrb[0].mxu0
    %1284 = vmatprep.mubr.f32.mxu0 0.0
    %v1285 = vand.u32 %v899, 4294901760
    %v1286 = vsub.f32 %v899, %v1285
    %1287 = vmatmul.mubr.f32.gmra.mrb[0].mxu0 %v1286
    %v1288 = vpop.f32.mrb[0].mxu0
    %v1289 = vadd.f32 %v1165, %v1288
    %v1290 = vpop.f32.mrb[0].mxu0
    %1291 = vmatprep.mubr.f32.mxu0 0.0
    %v1292 = vand.u32 %v902, 4294901760
    %v1293 = vsub.f32 %v902, %v1292
    %1294 = vmatmul.mubr.f32.gmra.mrb[0].mxu0 %v1293
    %v1295 = vpop.f32.mrb[0].mxu0
    %v1296 = vadd.f32 %v1171, %v1295
    %v1297 = vpop.f32.mrb[0].mxu0
    %1298 = vmatprep.mubr.f32.mxu0 0.0
    %v1299 = vand.u32 %v905, 4294901760
    %v1300 = vsub.f32 %v905, %v1299
    %1301 = vmatmul.mubr.f32.gmra.mrb[0].mxu0 %v1300
    %v1302 = vpop.f32.mrb[0].mxu0
    %v1303 = vadd.f32 %v1177, %v1302
    %v1304 = vpop.f32.mrb[0].mxu0
    %1305 = vmatprep.mubr.f32.mxu0 0.0
    %v1306 = vand.u32 %v908, 4294901760
    %v1307 = vsub.f32 %v908, %v1306
    %1308 = vmatmul.mubr.f32.gmra.mrb[0].mxu0 %v1307
    %v1309 = vpop.f32.mrb[0].mxu0
    %v1310 = vadd.f32 %v1183, %v1309
    %v1311 = vpop.f32.mrb[0].mxu0
    %1312 = vmatprep.mubr.f32.mxu0 0.0
    %v1313 = vand.u32 %v911, 4294901760
    %v1314 = vsub.f32 %v911, %v1313
    %1315 = vmatmul.mubr.f32.gmra.mrb[0].mxu0 %v1314
    %v1316 = vpop.f32.mrb[0].mxu0
    %v1317 = vadd.f32 %v1189, %v1316
    %v1318 = vpop.f32.mrb[0].mxu0
    %1319 = vmatprep.mubr.f32.mxu0 0.0
    %v1320 = vand.u32 %v914, 4294901760
    %v1321 = vsub.f32 %v914, %v1320
    %1322 = vmatmul.mubr.f32.gmra.mrb[0].mxu0 %v1321
    %v1323 = vpop.f32.mrb[0].mxu0
    %v1324 = vadd.f32 %v1195, %v1323
    %v1325 = vpop.f32.mrb[0].mxu0
    %1326 = vdwg.mxu0
    %1327 = vmatprep.subr.mxu0 0.0
    %v1328 = vand.u32 %v61, 4294901760
    %1329 = vmatpush1.msra.mxu0 %v1328
    %1330 = vmatprep.subr.mxu0 0.0
    %v1331 = vand.u32 %v62, 4294901760
    %1332 = vmatpush1.msra.mxu0 %v1331
    %1333 = vmatprep.subr.mxu0 0.0
    %v1334 = vand.u32 %v63, 4294901760
    %1335 = vmatpush1.msra.mxu0 %v1334
    %1336 = vmatprep.subr.mxu0 0.0
    %v1337 = vand.u32 %v64, 4294901760
    %1338 = vmatpush1.msra.mxu0 %v1337
    %1339 = vmatprep.subr.mxu0 0.0
    %1340 = vmatpush1.msra.mxu0 0.0
    %1341 = vmatprep.subr.mxu0 0.0
    %1342 = vmatpush1.msra.mxu0 0.0
    %1343 = vmatprep.subr.mxu0 0.0
    %1344 = vmatpush1.msra.mxu0 0.0
    %1345 = vmatprep.subr.mxu0 0.0
    %1346 = vmatpush1.msra.mxu0 0.0
    %1347 = vmatprep.subr.mxu0 0.0
    %1348 = vmatpush1.msra.mxu0 0.0
    %1349 = vmatprep.subr.mxu0 0.0
    %1350 = vmatpush1.msra.mxu0 0.0
    %1351 = vmatprep.subr.mxu0 0.0
    %1352 = vmatpush1.msra.mxu0 0.0
    %1353 = vmatprep.subr.mxu0 0.0
    %1354 = vmatpush1.msra.mxu0 0.0
    %1355 = vmatprep.subr.mxu0 0.0
    %1356 = vmatpush1.msra.mxu0 0.0
    %1357 = vmatprep.subr.mxu0 0.0
    %1358 = vmatpush1.msra.mxu0 0.0
    %1359 = vmatprep.subr.mxu0 0.0
    %1360 = vmatpush1.msra.mxu0 0.0
    %1361 = vmatprep.subr.mxu0 0.0
    %1362 = vmatpush1.msra.mxu0 0.0
    %1363 = vmatprep.subr.mxu0 0.0
    %1364 = vmatpush1.msra.mxu0 0.0
    %1365 = vmatprep.subr.mxu0 0.0
    %1366 = vmatpush1.msra.mxu0 0.0
    %1367 = vmatprep.subr.mxu0 0.0
    %1368 = vmatpush1.msra.mxu0 0.0
    %1369 = vmatprep.subr.mxu0 0.0
    %1370 = vmatpush1.msra.mxu0 0.0
    %1371 = vmatprep.subr.mxu0 0.0
    %1372 = vmatpush1.msra.mxu0 0.0
    %1373 = vmatprep.subr.mxu0 0.0
    %1374 = vmatpush1.msra.mxu0 0.0
    %1375 = vmatprep.subr.mxu0 0.0
    %1376 = vmatpush1.msra.mxu0 0.0
    %1377 = vmatprep.subr.mxu0 0.0
    %1378 = vmatpush1.msra.mxu0 0.0
    %1379 = vmatprep.subr.mxu0 0.0
    %1380 = vmatpush1.msra.mxu0 0.0
    %1381 = vmatprep.subr.mxu0 0.0
    %1382 = vmatpush1.msra.mxu0 0.0
    %1383 = vmatprep.subr.mxu0 0.0
    %1384 = vmatpush1.msra.mxu0 0.0
    %1385 = vmatprep.subr.mxu0 0.0
    %1386 = vmatpush1.msra.mxu0 0.0
    %1387 = vmatprep.subr.mxu0 0.0
    %1388 = vmatpush1.msra.mxu0 0.0
    %1389 = vmatprep.subr.mxu0 0.0
    %1390 = vmatpush1.msra.mxu0 0.0
    %1391 = vmatprep.subr.mxu0 0.0
    %1392 = vmatpush1.msra.mxu0 0.0
    %1393 = vmatprep.subr.mxu0 0.0
    %1394 = vmatpush1.msra.mxu0 0.0
    %1395 = vmatprep.mubr.f32.mxu0 0.0
    %v1396 = vand.u32 %v893, 4294901760
    %v1397 = vsub.f32 %v893, %v1396
    %v1398 = vand.u32 %v1397, 4294901760
    %1399 = vmatmul.mubr.f32.gmra.mrb[0].mxu0 %v1398
    %v1400 = vpop.f32.mrb[0].mxu0
    %v1401 = vadd.f32 %v1275, %v1400
    %v1402 = vpop.f32.mrb[0].mxu0
    %1403 = vmatprep.mubr.f32.mxu0 0.0
    %v1404 = vand.u32 %v896, 4294901760
    %v1405 = vsub.f32 %v896, %v1404
    %v1406 = vand.u32 %v1405, 4294901760
    %1407 = vmatmul.mubr.f32.gmra.mrb[0].mxu0 %v1406
    %v1408 = vpop.f32.mrb[0].mxu0
    %v1409 = vadd.f32 %v1282, %v1408
    %v1410 = vpop.f32.mrb[0].mxu0
    %1411 = vmatprep.mubr.f32.mxu0 0.0
    %v1412 = vand.u32 %v899, 4294901760
    %v1413 = vsub.f32 %v899, %v1412
    %v1414 = vand.u32 %v1413, 4294901760
    %1415 = vmatmul.mubr.f32.gmra.mrb[0].mxu0 %v1414
    %v1416 = vpop.f32.mrb[0].mxu0
    %v1417 = vadd.f32 %v1289, %v1416
    %v1418 = vpop.f32.mrb[0].mxu0
    %1419 = vmatprep.mubr.f32.mxu0 0.0
    %v1420 = vand.u32 %v902, 4294901760
    %v1421 = vsub.f32 %v902, %v1420
    %v1422 = vand.u32 %v1421, 4294901760
    %1423 = vmatmul.mubr.f32.gmra.mrb[0].mxu0 %v1422
    %v1424 = vpop.f32.mrb[0].mxu0
    %v1425 = vadd.f32 %v1296, %v1424
    %v1426 = vpop.f32.mrb[0].mxu0
    %1427 = vmatprep.mubr.f32.mxu0 0.0
    %v1428 = vand.u32 %v905, 4294901760
    %v1429 = vsub.f32 %v905, %v1428
    %v1430 = vand.u32 %v1429, 4294901760
    %1431 = vmatmul.mubr.f32.gmra.mrb[0].mxu0 %v1430
    %v1432 = vpop.f32.mrb[0].mxu0
    %v1433 = vadd.f32 %v1303, %v1432
    %v1434 = vpop.f32.mrb[0].mxu0
    %1435 = vmatprep.mubr.f32.mxu0 0.0
    %v1436 = vand.u32 %v908, 4294901760
    %v1437 = vsub.f32 %v908, %v1436
    %v1438 = vand.u32 %v1437, 4294901760
    %1439 = vmatmul.mubr.f32.gmra.mrb[0].mxu0 %v1438
    %v1440 = vpop.f32.mrb[0].mxu0
    %v1441 = vadd.f32 %v1310, %v1440
    %v1442 = vpop.f32.mrb[0].mxu0
    %1443 = vmatprep.mubr.f32.mxu0 0.0
    %v1444 = vand.u32 %v911, 4294901760
    %v1445 = vsub.f32 %v911, %v1444
    %v1446 = vand.u32 %v1445, 4294901760
    %1447 = vmatmul.mubr.f32.gmra.mrb[0].mxu0 %v1446
    %v1448 = vpop.f32.mrb[0].mxu0
    %v1449 = vadd.f32 %v1317, %v1448
    %v1450 = vpop.f32.mrb[0].mxu0
    %1451 = vmatprep.mubr.f32.mxu0 0.0
    %v1452 = vand.u32 %v914, 4294901760
    %v1453 = vsub.f32 %v914, %v1452
    %v1454 = vand.u32 %v1453, 4294901760
    %1455 = vmatmul.mubr.f32.gmra.mrb[0].mxu0 %v1454
    %v1456 = vpop.f32.mrb[0].mxu0
    %v1457 = vadd.f32 %v1324, %v1456
    %v1458 = vpop.f32.mrb[0].mxu0
    %1459 = vdwg.mxu0
    %1460 = vmatprep.subr.mxu0 0.0
    %v1461 = vand.u32 %v61, 4294901760
    %v1462 = vsub.f32 %v61, %v1461
    %v1463 = vand.u32 %v1462, 4294901760
    %1464 = vmatpush1.msra.mxu0 %v1463
    %1465 = vmatprep.subr.mxu0 0.0
    %v1466 = vand.u32 %v62, 4294901760
    %v1467 = vsub.f32 %v62, %v1466
    %v1468 = vand.u32 %v1467, 4294901760
    %1469 = vmatpush1.msra.mxu0 %v1468
    %1470 = vmatprep.subr.mxu0 0.0
    %v1471 = vand.u32 %v63, 4294901760
    %v1472 = vsub.f32 %v63, %v1471
    %v1473 = vand.u32 %v1472, 4294901760
    %1474 = vmatpush1.msra.mxu0 %v1473
    %1475 = vmatprep.subr.mxu0 0.0
    %v1476 = vand.u32 %v64, 4294901760
    %v1477 = vsub.f32 %v64, %v1476
    %v1478 = vand.u32 %v1477, 4294901760
    %1479 = vmatpush1.msra.mxu0 %v1478
    %1480 = vmatprep.subr.mxu0 0.0
    %1481 = vmatpush1.msra.mxu0 0.0
    %1482 = vmatprep.subr.mxu0 0.0
    %1483 = vmatpush1.msra.mxu0 0.0
    %1484 = vmatprep.subr.mxu0 0.0
    %1485 = vmatpush1.msra.mxu0 0.0
    %1486 = vmatprep.subr.mxu0 0.0
    %1487 = vmatpush1.msra.mxu0 0.0
    %1488 = vmatprep.subr.mxu0 0.0
    %1489 = vmatpush1.msra.mxu0 0.0
    %1490 = vmatprep.subr.mxu0 0.0
    %1491 = vmatpush1.msra.mxu0 0.0
    %1492 = vmatprep.subr.mxu0 0.0
    %1493 = vmatpush1.msra.mxu0 0.0
    %1494 = vmatprep.subr.mxu0 0.0
    %1495 = vmatpush1.msra.mxu0 0.0
    %1496 = vmatprep.subr.mxu0 0.0
    %1497 = vmatpush1.msra.mxu0 0.0
    %1498 = vmatprep.subr.mxu0 0.0
    %1499 = vmatpush1.msra.mxu0 0.0
    %1500 = vmatprep.subr.mxu0 0.0
    %1501 = vmatpush1.msra.mxu0 0.0
    %1502 = vmatprep.subr.mxu0 0.0
    %1503 = vmatpush1.msra.mxu0 0.0
    %1504 = vmatprep.subr.mxu0 0.0
    %1505 = vmatpush1.msra.mxu0 0.0
    %1506 = vmatprep.subr.mxu0 0.0
    %1507 = vmatpush1.msra.mxu0 0.0
    %1508 = vmatprep.subr.mxu0 0.0
    %1509 = vmatpush1.msra.mxu0 0.0
    %1510 = vmatprep.subr.mxu0 0.0
    %1511 = vmatpush1.msra.mxu0 0.0
    %1512 = vmatprep.subr.mxu0 0.0
    %1513 = vmatpush1.msra.mxu0 0.0
    %1514 = vmatprep.subr.mxu0 0.0
    %1515 = vmatpush1.msra.mxu0 0.0
    %1516 = vmatprep.subr.mxu0 0.0
    %1517 = vmatpush1.msra.mxu0 0.0
    %1518 = vmatprep.subr.mxu0 0.0
    %1519 = vmatpush1.msra.mxu0 0.0
    %1520 = vmatprep.subr.mxu0 0.0
    %1521 = vmatpush1.msra.mxu0 0.0
    %1522 = vmatprep.subr.mxu0 0.0
    %1523 = vmatpush1.msra.mxu0 0.0
    %1524 = vmatprep.subr.mxu0 0.0
    %1525 = vmatpush1.msra.mxu0 0.0
    %1526 = vmatprep.subr.mxu0 0.0
    %1527 = vmatpush1.msra.mxu0 0.0
    %1528 = vmatprep.subr.mxu0 0.0
    %1529 = vmatpush1.msra.mxu0 0.0
    %1530 = vmatprep.subr.mxu0 0.0
    %1531 = vmatpush1.msra.mxu0 0.0
    %1532 = vmatprep.subr.mxu0 0.0
    %1533 = vmatpush1.msra.mxu0 0.0
    %1534 = vmatprep.subr.mxu0 0.0
    %1535 = vmatpush1.msra.mxu0 0.0
    %1536 = vmatprep.mubr.f32.mxu0 0.0
    %v1537 = vand.u32 %v893, 4294901760
    %1538 = vmatmul.mubr.f32.gmra.mrb[0].mxu0 %v1537
    %v1539 = vpop.f32.mrb[0].mxu0
    %v1540 = vadd.f32 %v1401, %v1539
    %v1541 = vpop.f32.mrb[0].mxu0
    %1542 = vmatprep.mubr.f32.mxu0 0.0
    %v1543 = vand.u32 %v896, 4294901760
    %1544 = vmatmul.mubr.f32.gmra.mrb[0].mxu0 %v1543
    %v1545 = vpop.f32.mrb[0].mxu0
    %v1546 = vadd.f32 %v1409, %v1545
    %v1547 = vpop.f32.mrb[0].mxu0
    %1548 = vmatprep.mubr.f32.mxu0 0.0
    %v1549 = vand.u32 %v899, 4294901760
    %1550 = vmatmul.mubr.f32.gmra.mrb[0].mxu0 %v1549
    %v1551 = vpop.f32.mrb[0].mxu0
    %v1552 = vadd.f32 %v1417, %v1551
    %v1553 = vpop.f32.mrb[0].mxu0
    %1554 = vmatprep.mubr.f32.mxu0 0.0
    %v1555 = vand.u32 %v902, 4294901760
    %1556 = vmatmul.mubr.f32.gmra.mrb[0].mxu0 %v1555
    %v1557 = vpop.f32.mrb[0].mxu0
    %v1558 = vadd.f32 %v1425, %v1557
    %v1559 = vpop.f32.mrb[0].mxu0
    %1560 = vmatprep.mubr.f32.mxu0 0.0
    %v1561 = vand.u32 %v905, 4294901760
    %1562 = vmatmul.mubr.f32.gmra.mrb[0].mxu0 %v1561
    %v1563 = vpop.f32.mrb[0].mxu0
    %v1564 = vadd.f32 %v1433, %v1563
    %v1565 = vpop.f32.mrb[0].mxu0
    %1566 = vmatprep.mubr.f32.mxu0 0.0
    %v1567 = vand.u32 %v908, 4294901760
    %1568 = vmatmul.mubr.f32.gmra.mrb[0].mxu0 %v1567
    %v1569 = vpop.f32.mrb[0].mxu0
    %v1570 = vadd.f32 %v1441, %v1569
    %v1571 = vpop.f32.mrb[0].mxu0
    %1572 = vmatprep.mubr.f32.mxu0 0.0
    %v1573 = vand.u32 %v911, 4294901760
    %1574 = vmatmul.mubr.f32.gmra.mrb[0].mxu0 %v1573
    %v1575 = vpop.f32.mrb[0].mxu0
    %v1576 = vadd.f32 %v1449, %v1575
    %v1577 = vpop.f32.mrb[0].mxu0
    %1578 = vmatprep.mubr.f32.mxu0 0.0
    %v1579 = vand.u32 %v914, 4294901760
    %1580 = vmatmul.mubr.f32.gmra.mrb[0].mxu0 %v1579
    %v1581 = vpop.f32.mrb[0].mxu0
    %v1582 = vadd.f32 %v1457, %v1581
    %v1583 = vpop.f32.mrb[0].mxu0
    %1584 = vdwg.mxu0
    %1585 = vmatprep.subr.mxu0 0.0
    %v1586 = vand.u32 %v61, 4294901760
    %1587 = vmatpush1.msra.mxu0 %v1586
    %1588 = vmatprep.subr.mxu0 0.0
    %v1589 = vand.u32 %v62, 4294901760
    %1590 = vmatpush1.msra.mxu0 %v1589
    %1591 = vmatprep.subr.mxu0 0.0
    %v1592 = vand.u32 %v63, 4294901760
    %1593 = vmatpush1.msra.mxu0 %v1592
    %1594 = vmatprep.subr.mxu0 0.0
    %v1595 = vand.u32 %v64, 4294901760
    %1596 = vmatpush1.msra.mxu0 %v1595
    %1597 = vmatprep.subr.mxu0 0.0
    %1598 = vmatpush1.msra.mxu0 0.0
    %1599 = vmatprep.subr.mxu0 0.0
    %1600 = vmatpush1.msra.mxu0 0.0
    %1601 = vmatprep.subr.mxu0 0.0
    %1602 = vmatpush1.msra.mxu0 0.0
    %1603 = vmatprep.subr.mxu0 0.0
    %1604 = vmatpush1.msra.mxu0 0.0
    %1605 = vmatprep.subr.mxu0 0.0
    %1606 = vmatpush1.msra.mxu0 0.0
    %1607 = vmatprep.subr.mxu0 0.0
    %1608 = vmatpush1.msra.mxu0 0.0
    %1609 = vmatprep.subr.mxu0 0.0
    %1610 = vmatpush1.msra.mxu0 0.0
    %1611 = vmatprep.subr.mxu0 0.0
    %1612 = vmatpush1.msra.mxu0 0.0
    %1613 = vmatprep.subr.mxu0 0.0
    %1614 = vmatpush1.msra.mxu0 0.0
    %1615 = vmatprep.subr.mxu0 0.0
    %1616 = vmatpush1.msra.mxu0 0.0
    %1617 = vmatprep.subr.mxu0 0.0
    %1618 = vmatpush1.msra.mxu0 0.0
    %1619 = vmatprep.subr.mxu0 0.0
    %1620 = vmatpush1.msra.mxu0 0.0
    %1621 = vmatprep.subr.mxu0 0.0
    %1622 = vmatpush1.msra.mxu0 0.0
    %1623 = vmatprep.subr.mxu0 0.0
    %1624 = vmatpush1.msra.mxu0 0.0
    %1625 = vmatprep.subr.mxu0 0.0
    %1626 = vmatpush1.msra.mxu0 0.0
    %1627 = vmatprep.subr.mxu0 0.0
    %1628 = vmatpush1.msra.mxu0 0.0
    %1629 = vmatprep.subr.mxu0 0.0
    %1630 = vmatpush1.msra.mxu0 0.0
    %1631 = vmatprep.subr.mxu0 0.0
    %1632 = vmatpush1.msra.mxu0 0.0
    %1633 = vmatprep.subr.mxu0 0.0
    %1634 = vmatpush1.msra.mxu0 0.0
    %1635 = vmatprep.subr.mxu0 0.0
    %1636 = vmatpush1.msra.mxu0 0.0
    %1637 = vmatprep.subr.mxu0 0.0
    %1638 = vmatpush1.msra.mxu0 0.0
    %1639 = vmatprep.subr.mxu0 0.0
    %1640 = vmatpush1.msra.mxu0 0.0
    %1641 = vmatprep.subr.mxu0 0.0
    %1642 = vmatpush1.msra.mxu0 0.0
    %1643 = vmatprep.subr.mxu0 0.0
    %1644 = vmatpush1.msra.mxu0 0.0
    %1645 = vmatprep.subr.mxu0 0.0
    %1646 = vmatpush1.msra.mxu0 0.0
    %1647 = vmatprep.subr.mxu0 0.0
    %1648 = vmatpush1.msra.mxu0 0.0
    %1649 = vmatprep.subr.mxu0 0.0
    %1650 = vmatpush1.msra.mxu0 0.0
    %1651 = vmatprep.subr.mxu0 0.0
    %1652 = vmatpush1.msra.mxu0 0.0
    %1653 = vmatprep.mubr.f32.mxu0 0.0
    %v1654 = vand.u32 %v893, 4294901760
    %1655 = vmatmul.mubr.f32.gmra.mrb[0].mxu0 %v1654
    %v1656 = vpop.f32.mrb[0].mxu0
    %v1657 = vadd.f32 %v1540, %v1656
    %v1658 = vpop.f32.mrb[0].mxu0
    %1659 = vmatprep.mubr.f32.mxu0 0.0
    %v1660 = vand.u32 %v896, 4294901760
    %1661 = vmatmul.mubr.f32.gmra.mrb[0].mxu0 %v1660
    %v1662 = vpop.f32.mrb[0].mxu0
    %v1663 = vadd.f32 %v1546, %v1662
    %v1664 = vpop.f32.mrb[0].mxu0
    %1665 = vmatprep.mubr.f32.mxu0 0.0
    %v1666 = vand.u32 %v899, 4294901760
    %1667 = vmatmul.mubr.f32.gmra.mrb[0].mxu0 %v1666
    %v1668 = vpop.f32.mrb[0].mxu0
    %v1669 = vadd.f32 %v1552, %v1668
    %v1670 = vpop.f32.mrb[0].mxu0
    %1671 = vmatprep.mubr.f32.mxu0 0.0
    %v1672 = vand.u32 %v902, 4294901760
    %1673 = vmatmul.mubr.f32.gmra.mrb[0].mxu0 %v1672
    %v1674 = vpop.f32.mrb[0].mxu0
    %v1675 = vadd.f32 %v1558, %v1674
    %v1676 = vpop.f32.mrb[0].mxu0
    %1677 = vmatprep.mubr.f32.mxu0 0.0
    %v1678 = vand.u32 %v905, 4294901760
    %1679 = vmatmul.mubr.f32.gmra.mrb[0].mxu0 %v1678
    %v1680 = vpop.f32.mrb[0].mxu0
    %v1681 = vadd.f32 %v1564, %v1680
    %v1682 = vpop.f32.mrb[0].mxu0
    %1683 = vmatprep.mubr.f32.mxu0 0.0
    %v1684 = vand.u32 %v908, 4294901760
    %1685 = vmatmul.mubr.f32.gmra.mrb[0].mxu0 %v1684
    %v1686 = vpop.f32.mrb[0].mxu0
    %v1687 = vadd.f32 %v1570, %v1686
    %v1688 = vpop.f32.mrb[0].mxu0
    %1689 = vmatprep.mubr.f32.mxu0 0.0
    %v1690 = vand.u32 %v911, 4294901760
    %1691 = vmatmul.mubr.f32.gmra.mrb[0].mxu0 %v1690
    %v1692 = vpop.f32.mrb[0].mxu0
    %v1693 = vadd.f32 %v1576, %v1692
    %v1694 = vpop.f32.mrb[0].mxu0
    %1695 = vmatprep.mubr.f32.mxu0 0.0
    %v1696 = vand.u32 %v914, 4294901760
    %1697 = vmatmul.mubr.f32.gmra.mrb[0].mxu0 %v1696
    %v1698 = vpop.f32.mrb[0].mxu0
    %v1699 = vadd.f32 %v1582, %v1698
    %v1700 = vpop.f32.mrb[0].mxu0
    %1701 = vdwg.mxu0
    %v1702 = vmul.f32 %v839, %v1657
    %v1703 = vmul.f32 %v845, %v1663
    %v1704 = vmul.f32 %v851, %v1669
    %v1705 = vmul.f32 %v857, %v1675
    %v1706 = vmul.f32 %v863, %v1681
    %v1707 = vmul.f32 %v869, %v1687
    %v1708 = vmul.f32 %v875, %v1693
    %v1709 = vmul.f32 %v881, %v1699
    %vm1710 = vcmask 130048
    %v1711 = vsel %vm1710, %v1702, 0.0
    %v1712 = vsel %vm1710, %v1703, 0.0
    %v1713 = vadd.f32 %v1711, %v1712
    %v1714 = vsel %vm1710, %v1704, 0.0
    %v1715 = vadd.f32 %v1713, %v1714
    %v1716 = vsel %vm1710, %v1705, 0.0
    %v1717 = vadd.f32 %v1715, %v1716
    %v1718 = vrot.slane %v1717, 4
    %v1719 = vadd.f32 %v1717, %v1718
    %v1720 = vrot.slane %v1719, 2
    %v1721 = vadd.f32 %v1719, %v1720
    %v1722 = vrot.slane %v1721, 1
    %v1723 = vadd.f32 %v1721, %v1722
    %v1724 = vsel %vm1710, %v1706, 0.0
    %v1725 = vsel %vm1710, %v1707, 0.0
    %v1726 = vadd.f32 %v1724, %v1725
    %v1727 = vsel %vm1710, %v1708, 0.0
    %v1728 = vadd.f32 %v1726, %v1727
    %v1729 = vsel %vm1710, %v1709, 0.0
    %v1730 = vadd.f32 %v1728, %v1729
    %v1731 = vrot.slane %v1730, 4
    %v1732 = vadd.f32 %v1730, %v1731
    %v1733 = vrot.slane %v1732, 2
    %v1734 = vadd.f32 %v1732, %v1733
    %v1735 = vrot.slane %v1734, 1
    %v1736 = vadd.f32 %v1734, %v1735
    %vm1737 = vcmask 1040384
    %v1738 = vsel %vm1737, %v1723, %v1736
    %vm1739 = vcmask 123904
    %1740 = vst.msk [vmem:[#allocation2] sm:$0x3] %vm1739, %v1738
    // Predicated region
    $region18: #{tpu_custom_call.1} parent=1 // pred_check
      _
    $region19: #{tpu_custom_call.1} parent=1 // pred_check_branch
      %1742 = sbr.rel (0) target = $region21
    $region20: #{tpu_custom_call.1} parent=1 // pred_region
      %s1744 = ssub.s32 32, 32
      %1745 = vsyncadd [#allocation3], %s1744
      %s1747 = sshll.u32 [#allocation2], 4
      %s1748 = int_to_ptr.vmem [resolvable:$true] %s1747
      %1750 = dma.vmem_to_hbm [thread:$0]  %s1748, 32, %s4, [#allocation3]
    $region21: #{tpu_custom_call.1} parent=1 // pred_fallthru
      _
    // Predicated region
    $region22: #{tpu_custom_call.1} parent=1 // pred_check
      _
    $region23: #{tpu_custom_call.1} parent=1 // pred_check_branch
      %1752 = sbr.rel (0) target = $region25
    $region24: #{tpu_custom_call.1} parent=1 // pred_region
      %1753 = dma.done [#allocation3], 32
    $region25: #{tpu_custom_call.1} parent=1 // pred_fallthru
      _
    %1754 = vsyncpa [#allocation3], 1

</llo_original>
